<compile_context>
chip_gen: v7x
topology: tpu7x:2x2x1
jax: 0.10.0
libtpu: 0.0.40
codegen_flags: <defaults>
</compile_context>

<pallas_src>
import functools
import math

import jax
import jax.numpy as jnp
from jax import lax
from jax.experimental import pallas as pl
from jax.experimental.pallas import tpu as pltpu


def _round_up(x, m):
    return (x + m - 1) // m * m


# Contract the `in` dim of x (B, K) with the `in` dim of W (N, K): x @ W^T.
_DN = (((1,), (1,)), ((), ()))


def _mm(a_f32, w):
    """MXU matmul: cast the (small) activation to the streamed weight dtype.

    f32 weights -> pin HIGHEST precision (exactness); bf16 weights -> default.
    Accumulation is always f32.
    """
    prec = lax.Precision.HIGHEST if w.dtype == jnp.float32 else None
    return lax.dot_general(a_f32.astype(w.dtype), w, dimension_numbers=_DN,
                           preferred_element_type=jnp.float32, precision=prec)


# ----------------------------------------------------------------------------
# Kernels
# ----------------------------------------------------------------------------
def _train_kernel_single_k(x_ref, wmu_ref, wsig_ref, ein_ref, eout_ref, b_ref,
                           o_ref):
    x = x_ref[...]                               # (B, K) f32
    xs = x * ein_ref[...]                        # noise scaling in f32 (VPU)
    y = _mm(x, wmu_ref[...])                     # (B, tn) f32
    y += eout_ref[...] * _mm(xs, wsig_ref[...])  # rank-1 noise contribution
    o_ref[...] = (y + b_ref[...]).astype(o_ref.dtype)


def _train_kernel_multi_k(x_ref, wmu_ref, wsig_ref, ein_ref, eout_ref, b_ref,
                          o_ref, acc_ref, *, tk, x_resident):
    k = pl.program_id(1)

    @pl.when(k == 0)
    def _():
        acc_ref[...] = jnp.zeros_like(acc_ref)

    if x_resident:
        # Whole x stays resident in VMEM; slice the current K tile (128-aligned).
        off = pl.multiple_of(k * tk, tk)
        x = x_ref[:, pl.ds(off, tk)]
    else:
        x = x_ref[...]
    xs = x * ein_ref[...]
    y = _mm(x, wmu_ref[...])
    y += eout_ref[...] * _mm(xs, wsig_ref[...])
    acc_ref[...] += y

    @pl.when(k == pl.num_programs(1) - 1)
    def _():
        o_ref[...] = (acc_ref[...] + b_ref[...]).astype(o_ref.dtype)


def _eval_kernel_single_k(x_ref, wmu_ref, b_ref, o_ref):
    y = _mm(x_ref[...], wmu_ref[...])
    o_ref[...] = (y + b_ref[...]).astype(o_ref.dtype)


def _eval_kernel_multi_k(x_ref, wmu_ref, b_ref, o_ref, acc_ref, *, tk,
                         x_resident):
    k = pl.program_id(1)

    @pl.when(k == 0)
    def _():
        acc_ref[...] = jnp.zeros_like(acc_ref)

    if x_resident:
        off = pl.multiple_of(k * tk, tk)
        x = x_ref[:, pl.ds(off, tk)]
    else:
        x = x_ref[...]
    acc_ref[...] += _mm(x, wmu_ref[...])

    @pl.when(k == pl.num_programs(1) - 1)
    def _():
        o_ref[...] = (acc_ref[...] + b_ref[...]).astype(o_ref.dtype)


# ----------------------------------------------------------------------------
# Tile selection + one-time parameter preparation (pad once, cast once)
# ----------------------------------------------------------------------------
def _shrink_tile(t):
    return max(128, (t // 2) // 128 * 128)


def _choose_tiles(out_f, in_f, w_itemsize, tn_max=512, tk_max=1024,
                  weight_budget_bytes=16 << 20):
    tn = min(tn_max, _round_up(out_f, 128))
    tk = min(tk_max, _round_up(in_f, 128))
    # Keep the double-buffered weight tiles (2 tensors x 2 buffers) in budget.
    while 4 * tn * tk * w_itemsize > weight_budget_bytes and tk > 128:
        tk = _shrink_tile(tk)
    while 4 * tn * tk * w_itemsize > weight_budget_bytes and tn > 128:
        tn = _shrink_tile(tn)
    out_p = _round_up(out_f, tn)
    in_p = _round_up(in_f, tk)
    # v7x megacore: prefer >= 2 parallel out-tiles so both TensorCores get work.
    if out_p // tn < 2 and tn % 256 == 0:
        tn //= 2
    return tn, tk, out_p, in_p


def prepare_noisy_linear(params, *, weight_dtype=jnp.bfloat16,
                         tn_max=512, tk_max=1024):
    """One-time: pad to lane-dense 128-multiples, cast weights, fold bias."""
    out_f, in_f = params["weight_mu"].shape
    w_itemsize = jnp.dtype(weight_dtype).itemsize
    tn, tk, out_p, in_p = _choose_tiles(out_f, in_f, w_itemsize, tn_max, tk_max)

    def pad2(a):
        return jnp.pad(a, ((0, out_p - a.shape[0]), (0, in_p - a.shape[1])))

    def pad_out_row(a):
        return jnp.pad(a, (0, out_p - a.shape[0])).reshape(1, out_p)

    def pad_in_row(a):
        return jnp.pad(a, (0, in_p - a.shape[0])).reshape(1, in_p)

    b_eff = params["bias_mu"] + params["bias_sigma"] * params["bias_epsilon"]
    return dict(
        weight_mu=pad2(params["weight_mu"]).astype(weight_dtype),
        weight_sigma=pad2(params["weight_sigma"]).astype(weight_dtype),
        eps_in=pad_in_row(params["eps_in"]).astype(jnp.float32),
        eps_out=pad_out_row(params["eps_out"]).astype(jnp.float32),
        bias_mu=pad_out_row(params["bias_mu"]).astype(jnp.float32),
        bias_eff=pad_out_row(b_eff).astype(jnp.float32),
        meta=dict(out_f=out_f, in_f=in_f, out_p=out_p, in_p=in_p,
                  tn=tn, tk=tk, w_itemsize=w_itemsize),
    )


# ----------------------------------------------------------------------------
# Forward wrapper
# ----------------------------------------------------------------------------
def noisy_linear_forward(x, prep, training=True):
    """NoisyLinear forward (F.linear with factored noise) on prepared params."""
    m = prep["meta"]
    out_f, in_f = m["out_f"], m["in_f"]
    out_p, in_p, tn, tk = m["out_p"], m["in_p"], m["tn"], m["tk"]

    B = x.shape[0]
    B_p = _round_up(B, 8)
    x_p = jnp.pad(x.astype(jnp.float32), ((0, B_p - B), (0, in_p - in_f)))

    n_j = out_p // tn
    n_k = in_p // tk

    if n_k == 1:
        # Full K fits: no reduction axis, no accumulator, single dot per tile.
        grid = (n_j,)
        x_spec = pl.BlockSpec((B_p, in_p), lambda j: (0, 0))
        w_spec = pl.BlockSpec((tn, in_p), lambda j: (j, 0))
        ein_spec = pl.BlockSpec((1, in_p), lambda j: (0, 0))
        col_spec = pl.BlockSpec((1, tn), lambda j: (0, j))      # eps_out / bias
        o_spec = pl.BlockSpec((B_p, tn), lambda j: (0, j))
        scratch = []
        dims = ("parallel",)
        train_kernel = _train_kernel_single_k
        eval_kernel = _eval_kernel_single_k
    else:
        # Keep x resident in VMEM when small (DMA'd once, sliced per K step).
        x_resident = (B_p * in_p * 4) <= (4 << 20)
        grid = (n_j, n_k)
        if x_resident:
            x_spec = pl.BlockSpec((B_p, in_p), lambda j, k: (0, 0))
        else:
            x_spec = pl.BlockSpec((B_p, tk), lambda j, k: (0, k))
        w_spec = pl.BlockSpec((tn, tk), lambda j, k: (j, k))
        ein_spec = pl.BlockSpec((1, tk), lambda j, k: (0, k))
        col_spec = pl.BlockSpec((1, tn), lambda j, k: (0, j))
        o_spec = pl.BlockSpec((B_p, tn), lambda j, k: (0, j))
        scratch = [pltpu.VMEM((B_p, tn), jnp.float32)]
        dims = ("parallel", "arbitrary")
        train_kernel = functools.partial(_train_kernel_multi_k, tk=tk,
                                         x_resident=x_resident)
        eval_kernel = functools.partial(_eval_kernel_multi_k, tk=tk,
                                        x_resident=x_resident)

    # Raise the scoped-VMEM limit only when the estimate exceeds the smallest
    # generation default (~16 MiB on v5e); cap well below v7x's 64 MiB physical.
    n_w = 2 if training else 1
    est = (2 * n_w * tn * min(tk, in_p) * m["w_itemsize"]
           + 2 * B_p * in_p * 4 + 3 * B_p * tn * 4 + 4 * (in_p + out_p) * 4)
    vmem_limit = None
    if est > (12 << 20):
        vmem_limit = min(int(est * 3 // 2), 48 << 20)
    cparams = pltpu.CompilerParams(dimension_semantics=dims,
                                   vmem_limit_bytes=vmem_limit)

    out_shape = jax.ShapeDtypeStruct((B_p, out_p), x.dtype)

    if training:
        in_specs = [x_spec, w_spec, w_spec, ein_spec, col_spec, col_spec]
        args = (x_p, prep["weight_mu"], prep["weight_sigma"],
                prep["eps_in"], prep["eps_out"], prep["bias_eff"])
        kernel = train_kernel
    else:
        in_specs = [x_spec, w_spec, col_spec]
        args = (x_p, prep["weight_mu"], prep["bias_mu"])
        kernel = eval_kernel

    y = pl.pallas_call(
        kernel,
        out_shape=out_shape,
        grid_spec=pltpu.PrefetchScalarGridSpec(
            num_scalar_prefetch=0,
            grid=grid,
            in_specs=in_specs,
            out_specs=o_spec,
            scratch_shapes=scratch),
        compiler_params=cparams,
    )(*args)

    return y[:B, :out_f]


# ----------------------------------------------------------------------------
# Deterministic parameter / noise construction (mirrors __init__ + reset_*)
# ----------------------------------------------------------------------------
def _scale_noise(key, size):
    x = jax.random.normal(key, (size,), dtype=jnp.float32)
    return jnp.sign(x) * jnp.sqrt(jnp.abs(x))


def init_noisy_linear(key, in_features, out_features, std_init=0.5):
    k_wmu, k_bmu, k_ein, k_eout = jax.random.split(key, 4)
    mu_range = 1.0 / math.sqrt(in_features)

    weight_mu = jax.random.uniform(k_wmu, (out_features, in_features),
                                   minval=-mu_range, maxval=mu_range,
                                   dtype=jnp.float32)
    weight_sigma = jnp.full((out_features, in_features),
                            std_init / math.sqrt(in_features), dtype=jnp.float32)
    bias_mu = jax.random.uniform(k_bmu, (out_features,),
                                 minval=-mu_range, maxval=mu_range,
                                 dtype=jnp.float32)
    bias_sigma = jnp.full((out_features,),
                          std_init / math.sqrt(out_features), dtype=jnp.float32)

    eps_in = _scale_noise(k_ein, in_features)
    eps_out = _scale_noise(k_eout, out_features)

    return dict(weight_mu=weight_mu, weight_sigma=weight_sigma,
                bias_mu=bias_mu, bias_sigma=bias_sigma,
                eps_in=eps_in, eps_out=eps_out,
                # Full epsilon matrix kept only for the host-side reference;
                # the kernel consumes the factored vectors.
                weight_epsilon=jnp.outer(eps_out, eps_in),
                bias_epsilon=eps_out)


def _reference(x, params, training):
    if training:
        w = params["weight_mu"] + params["weight_sigma"] * params["weight_epsilon"]
        b = params["bias_mu"] + params["bias_sigma"] * params["bias_epsilon"]
    else:
        w, b = params["weight_mu"], params["bias_mu"]
    return x @ w.T + b


# ----------------------------------------------------------------------------
# Main
# ----------------------------------------------------------------------------
if __name__ == "__main__":
    key = jax.random.PRNGKey(0)
    k_param, k_x, k_param2, k_x2 = jax.random.split(key, 4)

    # ---- Test 1: small module shapes, single-K fast path -------------------
    B, in_features, out_features = 8, 32, 64
    params = init_noisy_linear(k_param, in_features, out_features, std_init=0.5)
    x = jax.random.normal(k_x, (B, in_features), dtype=jnp.float32)

    prep_f32 = prepare_noisy_linear(params, weight_dtype=jnp.float32)   # exact
    prep_bf16 = prepare_noisy_linear(params, weight_dtype=jnp.bfloat16)  # perf

    y_train = jax.block_until_ready(noisy_linear_forward(x, prep_f32, True))
    y_eval = jax.block_until_ready(noisy_linear_forward(x, prep_f32, False))
    y_train_bf16 = jax.block_until_ready(noisy_linear_forward(x, prep_bf16, True))
    y_eval_bf16 = jax.block_until_ready(noisy_linear_forward(x, prep_bf16, False))

    ref_train = _reference(x, params, True)
    ref_eval = _reference(x, params, False)
    assert jnp.allclose(y_train, ref_train, atol=1e-4, rtol=1e-4)
    assert jnp.allclose(y_eval, ref_eval, atol=1e-4, rtol=1e-4)
    assert jnp.allclose(y_train_bf16, ref_train, atol=5e-2, rtol=5e-2)
    assert jnp.allclose(y_eval_bf16, ref_eval, atol=5e-2, rtol=5e-2)

    # ---- Test 2: exercise the tiled multi-K (accumulator) path -------------
    B2, in2, out2 = 8, 256, 256
    params2 = init_noisy_linear(k_param2, in2, out2, std_init=0.5)
    x2 = jax.random.normal(k_x2, (B2, in2), dtype=jnp.float32)
    prep2 = prepare_noisy_linear(params2, weight_dtype=jnp.bfloat16,
                                 tn_max=128, tk_max=128)   # force 2x2 grid
    y2_train = jax.block_until_ready(noisy_linear_forward(x2, prep2, True))
    y2_eval = jax.block_until_ready(noisy_linear_forward(x2, prep2, False))
    assert jnp.allclose(y2_train, _reference(x2, params2, True),
                        atol=5e-2, rtol=5e-2)
    assert jnp.allclose(y2_eval, _reference(x2, params2, False),
                        atol=5e-2, rtol=5e-2)

    print("KERNEL_OK")
</pallas_src>

<mosaic_0001>
module attributes {stable_mosaic.version = 11 : i64} {
  func.func @_train_kernel_single_k(%arg0: i32, %arg1: memref<8x128xf32, #tpu.memory_space<vmem>>, %arg2: memref<128x128xf32, #tpu.memory_space<vmem>>, %arg3: memref<128x128xf32, #tpu.memory_space<vmem>>, %arg4: memref<1x128xf32, #tpu.memory_space<vmem>>, %arg5: memref<1x128xf32, #tpu.memory_space<vmem>>, %arg6: memref<1x128xf32, #tpu.memory_space<vmem>>, %arg7: memref<8x128xf32, #tpu.memory_space<vmem>>) attributes {dimension_semantics = [#tpu.dimension_semantics<parallel>], iteration_bounds = array<i64: 1>, scalar_prefetch = 0 : i64, scratch_operands = 0 : i64, tpu.core_type = #tpu.core_type<tc>, window_params = [{pipeline_mode = #tpu.pipeline_mode<synchronous>, transform_indices = @transform_0, window_bounds = array<i64: 8, 128>}, {transform_indices = @transform_1, window_bounds = array<i64: 128, 128>}, {transform_indices = @transform_2, window_bounds = array<i64: 128, 128>}, {pipeline_mode = #tpu.pipeline_mode<synchronous>, transform_indices = @transform_3, window_bounds = array<i64: 1, 128>}, {transform_indices = @transform_4, window_bounds = array<i64: 1, 128>}, {transform_indices = @transform_5, window_bounds = array<i64: 1, 128>}, {transform_indices = @transform_6, window_bounds = array<i64: 8, 128>}]} {
    %c0 = arith.constant 0 : index
    %c0_0 = arith.constant 0 : index
    %0 = vector.load %arg1[%c0, %c0_0] : memref<8x128xf32, #tpu.memory_space<vmem>>, vector<8x128xf32>
    %c0_1 = arith.constant 0 : index
    %c0_2 = arith.constant 0 : index
    %1 = vector.load %arg4[%c0_1, %c0_2] : memref<1x128xf32, #tpu.memory_space<vmem>>, vector<1x128xf32>
    %2 = vector.broadcast %1 : vector<1x128xf32> to vector<8x128xf32>
    %3 = arith.mulf %0, %2 : vector<8x128xf32>
    %c0_3 = arith.constant 0 : index
    %c0_4 = arith.constant 0 : index
    %4 = vector.load %arg2[%c0_3, %c0_4] : memref<128x128xf32, #tpu.memory_space<vmem>>, vector<128x128xf32>
    %cst = arith.constant dense<0.000000e+00> : vector<8x128xf32>
    %5 = tpu.matmul %0, %4, %cst {dimension_numbers = #tpu.dot_dimension_numbers<[1], [1], [0], [0], [0, 0, 1, 0], [], []>, precision = #tpu.contract_precision<fp32>} : vector<8x128xf32>, vector<128x128xf32>, vector<8x128xf32> -> vector<8x128xf32>
    %c0_5 = arith.constant 0 : index
    %c0_6 = arith.constant 0 : index
    %6 = vector.load %arg5[%c0_5, %c0_6] : memref<1x128xf32, #tpu.memory_space<vmem>>, vector<1x128xf32>
    %c0_7 = arith.constant 0 : index
    %c0_8 = arith.constant 0 : index
    %7 = vector.load %arg3[%c0_7, %c0_8] : memref<128x128xf32, #tpu.memory_space<vmem>>, vector<128x128xf32>
    %cst_9 = arith.constant dense<0.000000e+00> : vector<8x128xf32>
    %8 = tpu.matmul %3, %7, %cst_9 {dimension_numbers = #tpu.dot_dimension_numbers<[1], [1], [0], [0], [0, 0, 1, 0], [], []>, precision = #tpu.contract_precision<fp32>} : vector<8x128xf32>, vector<128x128xf32>, vector<8x128xf32> -> vector<8x128xf32>
    %9 = vector.broadcast %6 : vector<1x128xf32> to vector<8x128xf32>
    %10 = arith.mulf %9, %8 : vector<8x128xf32>
    %11 = arith.addf %5, %10 : vector<8x128xf32>
    %c0_10 = arith.constant 0 : index
    %c0_11 = arith.constant 0 : index
    %12 = vector.load %arg6[%c0_10, %c0_11] : memref<1x128xf32, #tpu.memory_space<vmem>>, vector<1x128xf32>
    %13 = vector.broadcast %12 : vector<1x128xf32> to vector<8x128xf32>
    %14 = arith.addf %11, %13 : vector<8x128xf32>
    %c0_12 = arith.constant 0 : index
    %c0_13 = arith.constant 0 : index
    %15 = vector.load %arg7[%c0_12, %c0_13] : memref<8x128xf32, #tpu.memory_space<vmem>>, vector<8x128xf32>
    tpu.vector_store %arg7[%c0_12, %c0_13], %14 {strides = array<i32>} : memref<8x128xf32, #tpu.memory_space<vmem>>, vector<8x128xf32>,
    return
  }
  func.func @transform_0(%arg0: i32) -> (i32, i32) {
    %c0_i32 = arith.constant 0 : i32
    %c0_i32_0 = arith.constant 0 : i32
    %c0_i32_1 = arith.constant 0 : i32
    return %c0_i32, %c0_i32_0 : i32, i32
  }
  func.func @transform_1(%arg0: i32) -> (i32, i32) {
    %c0_i32 = arith.constant 0 : i32
    %c0_i32_0 = arith.constant 0 : i32
    return %arg0, %c0_i32 : i32, i32
  }
  func.func @transform_2(%arg0: i32) -> (i32, i32) {
    %c0_i32 = arith.constant 0 : i32
    %c0_i32_0 = arith.constant 0 : i32
    return %arg0, %c0_i32 : i32, i32
  }
  func.func @transform_3(%arg0: i32) -> (i32, i32) {
    %c0_i32 = arith.constant 0 : i32
    %c0_i32_0 = arith.constant 0 : i32
    %c0_i32_1 = arith.constant 0 : i32
    return %c0_i32, %c0_i32_0 : i32, i32
  }
  func.func @transform_4(%arg0: i32) -> (i32, i32) {
    %c0_i32 = arith.constant 0 : i32
    %c0_i32_0 = arith.constant 0 : i32
    return %c0_i32, %arg0 : i32, i32
  }
  func.func @transform_5(%arg0: i32) -> (i32, i32) {
    %c0_i32 = arith.constant 0 : i32
    %c0_i32_0 = arith.constant 0 : i32
    return %c0_i32, %arg0 : i32, i32
  }
  func.func @transform_6(%arg0: i32) -> (i32, i32) {
    %c0_i32 = arith.constant 0 : i32
    %c0_i32_0 = arith.constant 0 : i32
    return %c0_i32, %arg0 : i32, i32
  }
}

</mosaic_0001>

<llo_original>
// kernel: tpu_custom_call.1
$region0: #{tpu_custom_call.1}
  #allocation0 [shape = 'u32[]', space=smem, size = 0x4, offset = 0x4, fixed_abs, tag = 'smem constant byte address 0x4 - core index']
  #allocation1 [shape = 'u32[144,128]{1,0:T(1,128)}', space=vmem, size = 0x12000, scoped, tag = 'internal scratch']
  %s0 = inlined_call_operand.hbm [shape: f32[8,128], index: 0, kind: input, shape index: {}]
  %s1 = inlined_call_operand.hbm [shape: f32[128,128], index: 1, kind: input, shape index: {}]
  %s2 = inlined_call_operand.hbm [shape: f32[128,128], index: 2, kind: input, shape index: {}]
  %s3 = inlined_call_operand.vmem [shape: f32[1,128], index: 3, kind: input, shape index: {}]
  %s4 = inlined_call_operand.vmem [shape: f32[1,128], index: 4, kind: input, shape index: {}]
  %s5 = inlined_call_operand.vmem [shape: f32[1,128], index: 5, kind: input, shape index: {}]
  %s6 = inlined_call_operand.hbm [shape: f32[8,128], index: 6, kind: output, shape index: {}]
  %s7 = sld [smem:[#allocation0]]
  $region46: #{tpu_custom_call.1} parent=0
    _
  %s9 = ssub.s32 1, %s7
  %s10 = scalar_select 0, %s9, %s7
  $region1: #{tpu_custom_call.1} parent=0
    #allocation2 [shape = 'u8[4096]{0}', space=vmem, size = 0x1000, scoped, tag = 'input window, operand 0, single buffered']
    #allocation3 [shape = 's32[1]{0}', space=sflag, size = 0x4, scoped, tag = 'scoped memory for tpu_custom_call.1']
    #allocation4 [shape = 's32[1]{0}', space=sflag, size = 0x4, scoped, tag = 'scoped memory for tpu_custom_call.1']
    #allocation5 [shape = 'u8[65536]{0}', space=vmem, size = 0x10000, scoped, tag = 'input window, operand 1, single buffered']
    #allocation6 [shape = 's32[1]{0}', space=sflag, size = 0x4, scoped, tag = 'scoped memory for tpu_custom_call.1']
    #allocation7 [shape = 'u8[65536]{0}', space=vmem, size = 0x10000, scoped, tag = 'input window, operand 2, single buffered']
    #allocation8 [shape = 'u8[4096]{0}', space=vmem, size = 0x1000, scoped, tag = 'output window, operand 0, single buffered']
    %11 = vsyncpa [#allocation3], 0
    %12 = vsyncpa [#allocation6], 0
    %13 = vsyncpa [#allocation4], 0
    // Predicated region
    $region2: #{tpu_custom_call.1} parent=1 // pred_check
      _
    $region3: #{tpu_custom_call.1} parent=1 // pred_check_branch
      %15 = sbr.rel (0) target = $region5
    $region4: #{tpu_custom_call.1} parent=1 // pred_region
      %s17 = ssub.s32 128, 128
      %18 = vsyncadd [#allocation3], %s17
      %s20 = sshll.u32 [#allocation2], 4
      %s21 = int_to_ptr.vmem [resolvable:$true] %s20
      %23 = dma.hbm_to_vmem [thread:$0]  %s0, 128, %s21, [#allocation3]
    $region5: #{tpu_custom_call.1} parent=1 // pred_fallthru
      _
    // Predicated region
    $region6: #{tpu_custom_call.1} parent=1 // pred_check
      _
    $region7: #{tpu_custom_call.1} parent=1 // pred_check_branch
      %25 = sbr.rel (0) target = $region9
    $region8: #{tpu_custom_call.1} parent=1 // pred_region
      %s27 = ssub.s32 2048, 2048
      %28 = vsyncadd [#allocation6], %s27
      %s29 = sshll.u32 [#allocation5], 4
      %s30 = int_to_ptr.vmem [resolvable:$true] %s29
      %35 = dma.hbm_to_vmem [thread:$0]  %s1, 2048, %s30, [#allocation6], 128, 128, 8
    $region9: #{tpu_custom_call.1} parent=1 // pred_fallthru
      _
    // Predicated region
    $region10: #{tpu_custom_call.1} parent=1 // pred_check
      _
    $region11: #{tpu_custom_call.1} parent=1 // pred_check_branch
      %37 = sbr.rel (0) target = $region13
    $region12: #{tpu_custom_call.1} parent=1 // pred_region
      %s39 = ssub.s32 2048, 2048
      %40 = vsyncadd [#allocation6], %s39
      %s41 = sshll.u32 [#allocation7], 4
      %s42 = int_to_ptr.vmem [resolvable:$true] %s41
      %47 = dma.hbm_to_vmem [thread:$0]  %s2, 2048, %s42, [#allocation6], 128, 128, 8
    $region13: #{tpu_custom_call.1} parent=1 // pred_fallthru
      _
    // Predicated region
    $region14: #{tpu_custom_call.1} parent=1 // pred_check
      _
    $region15: #{tpu_custom_call.1} parent=1 // pred_check_branch
      %49 = sbr.rel (0) target = $region17
    $region16: #{tpu_custom_call.1} parent=1 // pred_region
      _
    $region17: #{tpu_custom_call.1} parent=1 // pred_fallthru
      _
    // Predicated region
    $region18: #{tpu_custom_call.1} parent=1 // pred_check
      _
    $region19: #{tpu_custom_call.1} parent=1 // pred_check_branch
      %51 = sbr.rel (0) target = $region21
    $region20: #{tpu_custom_call.1} parent=1 // pred_region
      _
    $region21: #{tpu_custom_call.1} parent=1 // pred_fallthru
      _
    // Predicated region
    $region22: #{tpu_custom_call.1} parent=1 // pred_check
      _
    $region23: #{tpu_custom_call.1} parent=1 // pred_check_branch
      %53 = sbr.rel (0) target = $region25
    $region24: #{tpu_custom_call.1} parent=1 // pred_region
      _
    $region25: #{tpu_custom_call.1} parent=1 // pred_fallthru
      _
    // Predicated region
    $region26: #{tpu_custom_call.1} parent=1 // pred_check
      _
    $region27: #{tpu_custom_call.1} parent=1 // pred_check_branch
      %55 = sbr.rel (0) target = $region29
    $region28: #{tpu_custom_call.1} parent=1 // pred_region
      %56 = dma.done [#allocation3], 128
    $region29: #{tpu_custom_call.1} parent=1 // pred_fallthru
      _
    // Predicated region
    $region30: #{tpu_custom_call.1} parent=1 // pred_check
      _
    $region31: #{tpu_custom_call.1} parent=1 // pred_check_branch
      %58 = sbr.rel (0) target = $region33
    $region32: #{tpu_custom_call.1} parent=1 // pred_region
      %59 = dma.done [#allocation6], 2048
    $region33: #{tpu_custom_call.1} parent=1 // pred_fallthru
      _
    // Predicated region
    $region34: #{tpu_custom_call.1} parent=1 // pred_check
      _
    $region35: #{tpu_custom_call.1} parent=1 // pred_check_branch
      %61 = sbr.rel (0) target = $region37
    $region36: #{tpu_custom_call.1} parent=1 // pred_region
      %62 = dma.done [#allocation6], 2048
    $region37: #{tpu_custom_call.1} parent=1 // pred_fallthru
      _
    %v63 = vld [vmem:[#allocation2] sm:$0xff]
    %v64 = vld [vmem:[%s3] sm:$0x1]
    %v66 = vlaneseq
    %v67 = vshrl.u32 %v66, 7
    %v68 = vsub.s32 0, %v67
    %v69 = vrot.slane %v64, %v68
    %v71 = vmul.f32 %v63, %v69
    %v72 = vld [vmem:[#allocation5] sm:$0xff]
    %v73 = vld [vmem:[#allocation5 + $0x8] sm:$0xff]
    %v74 = vld [vmem:[#allocation5 + $0x10] sm:$0xff]
    %v75 = vld [vmem:[#allocation5 + $0x18] sm:$0xff]
    %v76 = vld [vmem:[#allocation5 + $0x20] sm:$0xff]
    %v77 = vld [vmem:[#allocation5 + $0x28] sm:$0xff]
    %v78 = vld [vmem:[#allocation5 + $0x30] sm:$0xff]
    %v79 = vld [vmem:[#allocation5 + $0x38] sm:$0xff]
    %v80 = vld [vmem:[#allocation5 + $0x40] sm:$0xff]
    %v81 = vld [vmem:[#allocation5 + $0x48] sm:$0xff]
    %v82 = vld [vmem:[#allocation5 + $0x50] sm:$0xff]
    %v83 = vld [vmem:[#allocation5 + $0x58] sm:$0xff]
    %v84 = vld [vmem:[#allocation5 + $0x60] sm:$0xff]
    %v85 = vld [vmem:[#allocation5 + $0x68] sm:$0xff]
    %v86 = vld [vmem:[#allocation5 + $0x70] sm:$0xff]
    %v87 = vld [vmem:[#allocation5 + $0x78] sm:$0xff]
    %v88 = vld [vmem:[%s4] sm:$0x1]
    %v89 = vld [vmem:[#allocation7] sm:$0xff]
    %v90 = vld [vmem:[#allocation7 + $0x8] sm:$0xff]
    %v91 = vld [vmem:[#allocation7 + $0x10] sm:$0xff]
    %v92 = vld [vmem:[#allocation7 + $0x18] sm:$0xff]
    %v93 = vld [vmem:[#allocation7 + $0x20] sm:$0xff]
    %v94 = vld [vmem:[#allocation7 + $0x28] sm:$0xff]
    %v95 = vld [vmem:[#allocation7 + $0x30] sm:$0xff]
    %v96 = vld [vmem:[#allocation7 + $0x38] sm:$0xff]
    %v97 = vld [vmem:[#allocation7 + $0x40] sm:$0xff]
    %v98 = vld [vmem:[#allocation7 + $0x48] sm:$0xff]
    %v99 = vld [vmem:[#allocation7 + $0x50] sm:$0xff]
    %v100 = vld [vmem:[#allocation7 + $0x58] sm:$0xff]
    %v101 = vld [vmem:[#allocation7 + $0x60] sm:$0xff]
    %v102 = vld [vmem:[#allocation7 + $0x68] sm:$0xff]
    %v103 = vld [vmem:[#allocation7 + $0x70] sm:$0xff]
    %v104 = vld [vmem:[#allocation7 + $0x78] sm:$0xff]
    %105 = vmatprep.subr.mxu0 0.0
    %v106 = vand.u32 %v89, 4294901760
    %107 = vmatpush1.xpose.msra.mxu0 %v106
    %108 = vmatprep.subr.mxu0 0.0
    %v109 = vand.u32 %v90, 4294901760
    %110 = vmatpush1.xpose.msra.mxu0 %v109
    %111 = vmatprep.subr.mxu0 0.0
    %v112 = vand.u32 %v91, 4294901760
    %113 = vmatpush1.xpose.msra.mxu0 %v112
    %114 = vmatprep.subr.mxu0 0.0
    %v115 = vand.u32 %v92, 4294901760
    %116 = vmatpush1.xpose.msra.mxu0 %v115
    %117 = vmatprep.subr.mxu0 0.0
    %v118 = vand.u32 %v93, 4294901760
    %119 = vmatpush1.xpose.msra.mxu0 %v118
    %120 = vmatprep.subr.mxu0 0.0
    %v121 = vand.u32 %v94, 4294901760
    %122 = vmatpush1.xpose.msra.mxu0 %v121
    %123 = vmatprep.subr.mxu0 0.0
    %v124 = vand.u32 %v95, 4294901760
    %125 = vmatpush1.xpose.msra.mxu0 %v124
    %126 = vmatprep.subr.mxu0 0.0
    %v127 = vand.u32 %v96, 4294901760
    %128 = vmatpush1.xpose.msra.mxu0 %v127
    %129 = vmatprep.subr.mxu0 0.0
    %v130 = vand.u32 %v97, 4294901760
    %131 = vmatpush1.xpose.msra.mxu0 %v130
    %132 = vmatprep.subr.mxu0 0.0
    %v133 = vand.u32 %v98, 4294901760
    %134 = vmatpush1.xpose.msra.mxu0 %v133
    %135 = vmatprep.subr.mxu0 0.0
    %v136 = vand.u32 %v99, 4294901760
    %137 = vmatpush1.xpose.msra.mxu0 %v136
    %138 = vmatprep.subr.mxu0 0.0
    %v139 = vand.u32 %v100, 4294901760
    %140 = vmatpush1.xpose.msra.mxu0 %v139
    %141 = vmatprep.subr.mxu0 0.0
    %v142 = vand.u32 %v101, 4294901760
    %143 = vmatpush1.xpose.msra.mxu0 %v142
    %144 = vmatprep.subr.mxu0 0.0
    %v145 = vand.u32 %v102, 4294901760
    %146 = vmatpush1.xpose.msra.mxu0 %v145
    %147 = vmatprep.subr.mxu0 0.0
    %v148 = vand.u32 %v103, 4294901760
    %149 = vmatpush1.xpose.msra.mxu0 %v148
    %150 = vmatprep.subr.mxu0 0.0
    %v151 = vand.u32 %v104, 4294901760
    %152 = vmatpush1.xpose.msra.mxu0 %v151
    %153 = vmatprep.subr.mxu0 0.0
    %154 = vmatpush1.xpose.msra.mxu0 0.0
    %155 = vmatprep.subr.mxu0 0.0
    %156 = vmatpush1.xpose.msra.mxu0 0.0
    %157 = vmatprep.subr.mxu0 0.0
    %158 = vmatpush1.xpose.msra.mxu0 0.0
    %159 = vmatprep.subr.mxu0 0.0
    %160 = vmatpush1.xpose.msra.mxu0 0.0
    %161 = vmatprep.subr.mxu0 0.0
    %162 = vmatpush1.xpose.msra.mxu0 0.0
    %163 = vmatprep.subr.mxu0 0.0
    %164 = vmatpush1.xpose.msra.mxu0 0.0
    %165 = vmatprep.subr.mxu0 0.0
    %166 = vmatpush1.xpose.msra.mxu0 0.0
    %167 = vmatprep.subr.mxu0 0.0
    %168 = vmatpush1.xpose.msra.mxu0 0.0
    %169 = vmatprep.subr.mxu0 0.0
    %170 = vmatpush1.xpose.msra.mxu0 0.0
    %171 = vmatprep.subr.mxu0 0.0
    %172 = vmatpush1.xpose.msra.mxu0 0.0
    %173 = vmatprep.subr.mxu0 0.0
    %174 = vmatpush1.xpose.msra.mxu0 0.0
    %175 = vmatprep.subr.mxu0 0.0
    %176 = vmatpush1.xpose.msra.mxu0 0.0
    %177 = vmatprep.subr.mxu0 0.0
    %178 = vmatpush1.xpose.msra.mxu0 0.0
    %179 = vmatprep.subr.mxu0 0.0
    %180 = vmatpush1.xpose.msra.mxu0 0.0
    %181 = vmatprep.subr.mxu0 0.0
    %182 = vmatpush1.xpose.msra.mxu0 0.0
    %183 = vmatprep.subr.mxu0 0.0
    %184 = vmatpush1.xpose.msra.mxu0 0.0
    %185 = vmatprep.mubr.f32.mxu0 0.0
    %v186 = vand.u32 %v71, 4294901760
    %v187 = vsub.f32 %v71, %v186
    %v188 = vand.u32 %v187, 4294901760
    %v189 = vsub.f32 %v187, %v188
    %v190 = vand.u32 %v189, 4294901760
    %191 = vmatmul.mubr.f32.gmra.mrb[0].mxu0 %v190
    %v192 = vpop.f32.mrb[0].mxu0
    %v193 = vadd.f32 0.0, %v192
    %v194 = vpop.f32.mrb[0].mxu0
    %195 = vdwg.mxu0
    %196 = vmatprep.subr.mxu0 0.0
    %v197 = vand.u32 %v89, 4294901760
    %v198 = vsub.f32 %v89, %v197
    %v199 = vand.u32 %v198, 4294901760
    %v200 = vsub.f32 %v198, %v199
    %v201 = vand.u32 %v200, 4294901760
    %202 = vmatpush1.xpose.msra.mxu0 %v201
    %203 = vmatprep.subr.mxu0 0.0
    %v204 = vand.u32 %v90, 4294901760
    %v205 = vsub.f32 %v90, %v204
    %v206 = vand.u32 %v205, 4294901760
    %v207 = vsub.f32 %v205, %v206
    %v208 = vand.u32 %v207, 4294901760
    %209 = vmatpush1.xpose.msra.mxu0 %v208
    %210 = vmatprep.subr.mxu0 0.0
    %v211 = vand.u32 %v91, 4294901760
    %v212 = vsub.f32 %v91, %v211
    %v213 = vand.u32 %v212, 4294901760
    %v214 = vsub.f32 %v212, %v213
    %v215 = vand.u32 %v214, 4294901760
    %216 = vmatpush1.xpose.msra.mxu0 %v215
    %217 = vmatprep.subr.mxu0 0.0
    %v218 = vand.u32 %v92, 4294901760
    %v219 = vsub.f32 %v92, %v218
    %v220 = vand.u32 %v219, 4294901760
    %v221 = vsub.f32 %v219, %v220
    %v222 = vand.u32 %v221, 4294901760
    %223 = vmatpush1.xpose.msra.mxu0 %v222
    %224 = vmatprep.subr.mxu0 0.0
    %v225 = vand.u32 %v93, 4294901760
    %v226 = vsub.f32 %v93, %v225
    %v227 = vand.u32 %v226, 4294901760
    %v228 = vsub.f32 %v226, %v227
    %v229 = vand.u32 %v228, 4294901760
    %230 = vmatpush1.xpose.msra.mxu0 %v229
    %231 = vmatprep.subr.mxu0 0.0
    %v232 = vand.u32 %v94, 4294901760
    %v233 = vsub.f32 %v94, %v232
    %v234 = vand.u32 %v233, 4294901760
    %v235 = vsub.f32 %v233, %v234
    %v236 = vand.u32 %v235, 4294901760
    %237 = vmatpush1.xpose.msra.mxu0 %v236
    %238 = vmatprep.subr.mxu0 0.0
    %v239 = vand.u32 %v95, 4294901760
    %v240 = vsub.f32 %v95, %v239
    %v241 = vand.u32 %v240, 4294901760
    %v242 = vsub.f32 %v240, %v241
    %v243 = vand.u32 %v242, 4294901760
    %244 = vmatpush1.xpose.msra.mxu0 %v243
    %245 = vmatprep.subr.mxu0 0.0
    %v246 = vand.u32 %v96, 4294901760
    %v247 = vsub.f32 %v96, %v246
    %v248 = vand.u32 %v247, 4294901760
    %v249 = vsub.f32 %v247, %v248
    %v250 = vand.u32 %v249, 4294901760
    %251 = vmatpush1.xpose.msra.mxu0 %v250
    %252 = vmatprep.subr.mxu0 0.0
    %v253 = vand.u32 %v97, 4294901760
    %v254 = vsub.f32 %v97, %v253
    %v255 = vand.u32 %v254, 4294901760
    %v256 = vsub.f32 %v254, %v255
    %v257 = vand.u32 %v256, 4294901760
    %258 = vmatpush1.xpose.msra.mxu0 %v257
    %259 = vmatprep.subr.mxu0 0.0
    %v260 = vand.u32 %v98, 4294901760
    %v261 = vsub.f32 %v98, %v260
    %v262 = vand.u32 %v261, 4294901760
    %v263 = vsub.f32 %v261, %v262
    %v264 = vand.u32 %v263, 4294901760
    %265 = vmatpush1.xpose.msra.mxu0 %v264
    %266 = vmatprep.subr.mxu0 0.0
    %v267 = vand.u32 %v99, 4294901760
    %v268 = vsub.f32 %v99, %v267
    %v269 = vand.u32 %v268, 4294901760
    %v270 = vsub.f32 %v268, %v269
    %v271 = vand.u32 %v270, 4294901760
    %272 = vmatpush1.xpose.msra.mxu0 %v271
    %273 = vmatprep.subr.mxu0 0.0
    %v274 = vand.u32 %v100, 4294901760
    %v275 = vsub.f32 %v100, %v274
    %v276 = vand.u32 %v275, 4294901760
    %v277 = vsub.f32 %v275, %v276
    %v278 = vand.u32 %v277, 4294901760
    %279 = vmatpush1.xpose.msra.mxu0 %v278
    %280 = vmatprep.subr.mxu0 0.0
    %v281 = vand.u32 %v101, 4294901760
    %v282 = vsub.f32 %v101, %v281
    %v283 = vand.u32 %v282, 4294901760
    %v284 = vsub.f32 %v282, %v283
    %v285 = vand.u32 %v284, 4294901760
    %286 = vmatpush1.xpose.msra.mxu0 %v285
    %287 = vmatprep.subr.mxu0 0.0
    %v288 = vand.u32 %v102, 4294901760
    %v289 = vsub.f32 %v102, %v288
    %v290 = vand.u32 %v289, 4294901760
    %v291 = vsub.f32 %v289, %v290
    %v292 = vand.u32 %v291, 4294901760
    %293 = vmatpush1.xpose.msra.mxu0 %v292
    %294 = vmatprep.subr.mxu0 0.0
    %v295 = vand.u32 %v103, 4294901760
    %v296 = vsub.f32 %v103, %v295
    %v297 = vand.u32 %v296, 4294901760
    %v298 = vsub.f32 %v296, %v297
    %v299 = vand.u32 %v298, 4294901760
    %300 = vmatpush1.xpose.msra.mxu0 %v299
    %301 = vmatprep.subr.mxu0 0.0
    %v302 = vand.u32 %v104, 4294901760
    %v303 = vsub.f32 %v104, %v302
    %v304 = vand.u32 %v303, 4294901760
    %v305 = vsub.f32 %v303, %v304
    %v306 = vand.u32 %v305, 4294901760
    %307 = vmatpush1.xpose.msra.mxu0 %v306
    %308 = vmatprep.subr.mxu0 0.0
    %309 = vmatpush1.xpose.msra.mxu0 0.0
    %310 = vmatprep.subr.mxu0 0.0
    %311 = vmatpush1.xpose.msra.mxu0 0.0
    %312 = vmatprep.subr.mxu0 0.0
    %313 = vmatpush1.xpose.msra.mxu0 0.0
    %314 = vmatprep.subr.mxu0 0.0
    %315 = vmatpush1.xpose.msra.mxu0 0.0
    %316 = vmatprep.subr.mxu0 0.0
    %317 = vmatpush1.xpose.msra.mxu0 0.0
    %318 = vmatprep.subr.mxu0 0.0
    %319 = vmatpush1.xpose.msra.mxu0 0.0
    %320 = vmatprep.subr.mxu0 0.0
    %321 = vmatpush1.xpose.msra.mxu0 0.0
    %322 = vmatprep.subr.mxu0 0.0
    %323 = vmatpush1.xpose.msra.mxu0 0.0
    %324 = vmatprep.subr.mxu0 0.0
    %325 = vmatpush1.xpose.msra.mxu0 0.0
    %326 = vmatprep.subr.mxu0 0.0
    %327 = vmatpush1.xpose.msra.mxu0 0.0
    %328 = vmatprep.subr.mxu0 0.0
    %329 = vmatpush1.xpose.msra.mxu0 0.0
    %330 = vmatprep.subr.mxu0 0.0
    %331 = vmatpush1.xpose.msra.mxu0 0.0
    %332 = vmatprep.subr.mxu0 0.0
    %333 = vmatpush1.xpose.msra.mxu0 0.0
    %334 = vmatprep.subr.mxu0 0.0
    %335 = vmatpush1.xpose.msra.mxu0 0.0
    %336 = vmatprep.subr.mxu0 0.0
    %337 = vmatpush1.xpose.msra.mxu0 0.0
    %338 = vmatprep.subr.mxu0 0.0
    %339 = vmatpush1.xpose.msra.mxu0 0.0
    %340 = vmatprep.mubr.f32.mxu0 0.0
    %v341 = vand.u32 %v71, 4294901760
    %342 = vmatmul.mubr.f32.gmra.mrb[0].mxu0 %v341
    %v343 = vpop.f32.mrb[0].mxu0
    %v344 = vadd.f32 %v193, %v343
    %v345 = vpop.f32.mrb[0].mxu0
    %346 = vdwg.mxu0
    %347 = vmatprep.subr.mxu0 0.0
    %v348 = vand.u32 %v89, 4294901760
    %v349 = vsub.f32 %v89, %v348
    %350 = vmatpush1.xpose.msra.mxu0 %v349
    %351 = vmatprep.subr.mxu0 0.0
    %v352 = vand.u32 %v90, 4294901760
    %v353 = vsub.f32 %v90, %v352
    %354 = vmatpush1.xpose.msra.mxu0 %v353
    %355 = vmatprep.subr.mxu0 0.0
    %v356 = vand.u32 %v91, 4294901760
    %v357 = vsub.f32 %v91, %v356
    %358 = vmatpush1.xpose.msra.mxu0 %v357
    %359 = vmatprep.subr.mxu0 0.0
    %v360 = vand.u32 %v92, 4294901760
    %v361 = vsub.f32 %v92, %v360
    %362 = vmatpush1.xpose.msra.mxu0 %v361
    %363 = vmatprep.subr.mxu0 0.0
    %v364 = vand.u32 %v93, 4294901760
    %v365 = vsub.f32 %v93, %v364
    %366 = vmatpush1.xpose.msra.mxu0 %v365
    %367 = vmatprep.subr.mxu0 0.0
    %v368 = vand.u32 %v94, 4294901760
    %v369 = vsub.f32 %v94, %v368
    %370 = vmatpush1.xpose.msra.mxu0 %v369
    %371 = vmatprep.subr.mxu0 0.0
    %v372 = vand.u32 %v95, 4294901760
    %v373 = vsub.f32 %v95, %v372
    %374 = vmatpush1.xpose.msra.mxu0 %v373
    %375 = vmatprep.subr.mxu0 0.0
    %v376 = vand.u32 %v96, 4294901760
    %v377 = vsub.f32 %v96, %v376
    %378 = vmatpush1.xpose.msra.mxu0 %v377
    %379 = vmatprep.subr.mxu0 0.0
    %v380 = vand.u32 %v97, 4294901760
    %v381 = vsub.f32 %v97, %v380
    %382 = vmatpush1.xpose.msra.mxu0 %v381
    %383 = vmatprep.subr.mxu0 0.0
    %v384 = vand.u32 %v98, 4294901760
    %v385 = vsub.f32 %v98, %v384
    %386 = vmatpush1.xpose.msra.mxu0 %v385
    %387 = vmatprep.subr.mxu0 0.0
    %v388 = vand.u32 %v99, 4294901760
    %v389 = vsub.f32 %v99, %v388
    %390 = vmatpush1.xpose.msra.mxu0 %v389
    %391 = vmatprep.subr.mxu0 0.0
    %v392 = vand.u32 %v100, 4294901760
    %v393 = vsub.f32 %v100, %v392
    %394 = vmatpush1.xpose.msra.mxu0 %v393
    %395 = vmatprep.subr.mxu0 0.0
    %v396 = vand.u32 %v101, 4294901760
    %v397 = vsub.f32 %v101, %v396
    %398 = vmatpush1.xpose.msra.mxu0 %v397
    %399 = vmatprep.subr.mxu0 0.0
    %v400 = vand.u32 %v102, 4294901760
    %v401 = vsub.f32 %v102, %v400
    %402 = vmatpush1.xpose.msra.mxu0 %v401
    %403 = vmatprep.subr.mxu0 0.0
    %v404 = vand.u32 %v103, 4294901760
    %v405 = vsub.f32 %v103, %v404
    %406 = vmatpush1.xpose.msra.mxu0 %v405
    %407 = vmatprep.subr.mxu0 0.0
    %v408 = vand.u32 %v104, 4294901760
    %v409 = vsub.f32 %v104, %v408
    %410 = vmatpush1.xpose.msra.mxu0 %v409
    %411 = vmatprep.subr.mxu0 0.0
    %412 = vmatpush1.xpose.msra.mxu0 0.0
    %413 = vmatprep.subr.mxu0 0.0
    %414 = vmatpush1.xpose.msra.mxu0 0.0
    %415 = vmatprep.subr.mxu0 0.0
    %416 = vmatpush1.xpose.msra.mxu0 0.0
    %417 = vmatprep.subr.mxu0 0.0
    %418 = vmatpush1.xpose.msra.mxu0 0.0
    %419 = vmatprep.subr.mxu0 0.0
    %420 = vmatpush1.xpose.msra.mxu0 0.0
    %421 = vmatprep.subr.mxu0 0.0
    %422 = vmatpush1.xpose.msra.mxu0 0.0
    %423 = vmatprep.subr.mxu0 0.0
    %424 = vmatpush1.xpose.msra.mxu0 0.0
    %425 = vmatprep.subr.mxu0 0.0
    %426 = vmatpush1.xpose.msra.mxu0 0.0
    %427 = vmatprep.subr.mxu0 0.0
    %428 = vmatpush1.xpose.msra.mxu0 0.0
    %429 = vmatprep.subr.mxu0 0.0
    %430 = vmatpush1.xpose.msra.mxu0 0.0
    %431 = vmatprep.subr.mxu0 0.0
    %432 = vmatpush1.xpose.msra.mxu0 0.0
    %433 = vmatprep.subr.mxu0 0.0
    %434 = vmatpush1.xpose.msra.mxu0 0.0
    %435 = vmatprep.subr.mxu0 0.0
    %436 = vmatpush1.xpose.msra.mxu0 0.0
    %437 = vmatprep.subr.mxu0 0.0
    %438 = vmatpush1.xpose.msra.mxu0 0.0
    %439 = vmatprep.subr.mxu0 0.0
    %440 = vmatpush1.xpose.msra.mxu0 0.0
    %441 = vmatprep.subr.mxu0 0.0
    %442 = vmatpush1.xpose.msra.mxu0 0.0
    %443 = vmatprep.mubr.f32.mxu0 0.0
    %v444 = vand.u32 %v71, 4294901760
    %v445 = vsub.f32 %v71, %v444
    %446 = vmatmul.mubr.f32.gmra.mrb[0].mxu0 %v445
    %v447 = vpop.f32.mrb[0].mxu0
    %v448 = vadd.f32 %v344, %v447
    %v449 = vpop.f32.mrb[0].mxu0
    %450 = vdwg.mxu0
    %451 = vmatprep.subr.mxu0 0.0
    %v452 = vand.u32 %v89, 4294901760
    %453 = vmatpush1.xpose.msra.mxu0 %v452
    %454 = vmatprep.subr.mxu0 0.0
    %v455 = vand.u32 %v90, 4294901760
    %456 = vmatpush1.xpose.msra.mxu0 %v455
    %457 = vmatprep.subr.mxu0 0.0
    %v458 = vand.u32 %v91, 4294901760
    %459 = vmatpush1.xpose.msra.mxu0 %v458
    %460 = vmatprep.subr.mxu0 0.0
    %v461 = vand.u32 %v92, 4294901760
    %462 = vmatpush1.xpose.msra.mxu0 %v461
    %463 = vmatprep.subr.mxu0 0.0
    %v464 = vand.u32 %v93, 4294901760
    %465 = vmatpush1.xpose.msra.mxu0 %v464
    %466 = vmatprep.subr.mxu0 0.0
    %v467 = vand.u32 %v94, 4294901760
    %468 = vmatpush1.xpose.msra.mxu0 %v467
    %469 = vmatprep.subr.mxu0 0.0
    %v470 = vand.u32 %v95, 4294901760
    %471 = vmatpush1.xpose.msra.mxu0 %v470
    %472 = vmatprep.subr.mxu0 0.0
    %v473 = vand.u32 %v96, 4294901760
    %474 = vmatpush1.xpose.msra.mxu0 %v473
    %475 = vmatprep.subr.mxu0 0.0
    %v476 = vand.u32 %v97, 4294901760
    %477 = vmatpush1.xpose.msra.mxu0 %v476
    %478 = vmatprep.subr.mxu0 0.0
    %v479 = vand.u32 %v98, 4294901760
    %480 = vmatpush1.xpose.msra.mxu0 %v479
    %481 = vmatprep.subr.mxu0 0.0
    %v482 = vand.u32 %v99, 4294901760
    %483 = vmatpush1.xpose.msra.mxu0 %v482
    %484 = vmatprep.subr.mxu0 0.0
    %v485 = vand.u32 %v100, 4294901760
    %486 = vmatpush1.xpose.msra.mxu0 %v485
    %487 = vmatprep.subr.mxu0 0.0
    %v488 = vand.u32 %v101, 4294901760
    %489 = vmatpush1.xpose.msra.mxu0 %v488
    %490 = vmatprep.subr.mxu0 0.0
    %v491 = vand.u32 %v102, 4294901760
    %492 = vmatpush1.xpose.msra.mxu0 %v491
    %493 = vmatprep.subr.mxu0 0.0
    %v494 = vand.u32 %v103, 4294901760
    %495 = vmatpush1.xpose.msra.mxu0 %v494
    %496 = vmatprep.subr.mxu0 0.0
    %v497 = vand.u32 %v104, 4294901760
    %498 = vmatpush1.xpose.msra.mxu0 %v497
    %499 = vmatprep.subr.mxu0 0.0
    %500 = vmatpush1.xpose.msra.mxu0 0.0
    %501 = vmatprep.subr.mxu0 0.0
    %502 = vmatpush1.xpose.msra.mxu0 0.0
    %503 = vmatprep.subr.mxu0 0.0
    %504 = vmatpush1.xpose.msra.mxu0 0.0
    %505 = vmatprep.subr.mxu0 0.0
    %506 = vmatpush1.xpose.msra.mxu0 0.0
    %507 = vmatprep.subr.mxu0 0.0
    %508 = vmatpush1.xpose.msra.mxu0 0.0
    %509 = vmatprep.subr.mxu0 0.0
    %510 = vmatpush1.xpose.msra.mxu0 0.0
    %511 = vmatprep.subr.mxu0 0.0
    %512 = vmatpush1.xpose.msra.mxu0 0.0
    %513 = vmatprep.subr.mxu0 0.0
    %514 = vmatpush1.xpose.msra.mxu0 0.0
    %515 = vmatprep.subr.mxu0 0.0
    %516 = vmatpush1.xpose.msra.mxu0 0.0
    %517 = vmatprep.subr.mxu0 0.0
    %518 = vmatpush1.xpose.msra.mxu0 0.0
    %519 = vmatprep.subr.mxu0 0.0
    %520 = vmatpush1.xpose.msra.mxu0 0.0
    %521 = vmatprep.subr.mxu0 0.0
    %522 = vmatpush1.xpose.msra.mxu0 0.0
    %523 = vmatprep.subr.mxu0 0.0
    %524 = vmatpush1.xpose.msra.mxu0 0.0
    %525 = vmatprep.subr.mxu0 0.0
    %526 = vmatpush1.xpose.msra.mxu0 0.0
    %527 = vmatprep.subr.mxu0 0.0
    %528 = vmatpush1.xpose.msra.mxu0 0.0
    %529 = vmatprep.subr.mxu0 0.0
    %530 = vmatpush1.xpose.msra.mxu0 0.0
    %531 = vmatprep.mubr.f32.mxu0 0.0
    %v532 = vand.u32 %v71, 4294901760
    %v533 = vsub.f32 %v71, %v532
    %v534 = vand.u32 %v533, 4294901760
    %535 = vmatmul.mubr.f32.gmra.mrb[0].mxu0 %v534
    %v536 = vpop.f32.mrb[0].mxu0
    %v537 = vadd.f32 %v448, %v536
    %v538 = vpop.f32.mrb[0].mxu0
    %539 = vdwg.mxu0
    %540 = vmatprep.subr.mxu0 0.0
    %v541 = vand.u32 %v89, 4294901760
    %v542 = vsub.f32 %v89, %v541
    %v543 = vand.u32 %v542, 4294901760
    %544 = vmatpush1.xpose.msra.mxu0 %v543
    %545 = vmatprep.subr.mxu0 0.0
    %v546 = vand.u32 %v90, 4294901760
    %v547 = vsub.f32 %v90, %v546
    %v548 = vand.u32 %v547, 4294901760
    %549 = vmatpush1.xpose.msra.mxu0 %v548
    %550 = vmatprep.subr.mxu0 0.0
    %v551 = vand.u32 %v91, 4294901760
    %v552 = vsub.f32 %v91, %v551
    %v553 = vand.u32 %v552, 4294901760
    %554 = vmatpush1.xpose.msra.mxu0 %v553
    %555 = vmatprep.subr.mxu0 0.0
    %v556 = vand.u32 %v92, 4294901760
    %v557 = vsub.f32 %v92, %v556
    %v558 = vand.u32 %v557, 4294901760
    %559 = vmatpush1.xpose.msra.mxu0 %v558
    %560 = vmatprep.subr.mxu0 0.0
    %v561 = vand.u32 %v93, 4294901760
    %v562 = vsub.f32 %v93, %v561
    %v563 = vand.u32 %v562, 4294901760
    %564 = vmatpush1.xpose.msra.mxu0 %v563
    %565 = vmatprep.subr.mxu0 0.0
    %v566 = vand.u32 %v94, 4294901760
    %v567 = vsub.f32 %v94, %v566
    %v568 = vand.u32 %v567, 4294901760
    %569 = vmatpush1.xpose.msra.mxu0 %v568
    %570 = vmatprep.subr.mxu0 0.0
    %v571 = vand.u32 %v95, 4294901760
    %v572 = vsub.f32 %v95, %v571
    %v573 = vand.u32 %v572, 4294901760
    %574 = vmatpush1.xpose.msra.mxu0 %v573
    %575 = vmatprep.subr.mxu0 0.0
    %v576 = vand.u32 %v96, 4294901760
    %v577 = vsub.f32 %v96, %v576
    %v578 = vand.u32 %v577, 4294901760
    %579 = vmatpush1.xpose.msra.mxu0 %v578
    %580 = vmatprep.subr.mxu0 0.0
    %v581 = vand.u32 %v97, 4294901760
    %v582 = vsub.f32 %v97, %v581
    %v583 = vand.u32 %v582, 4294901760
    %584 = vmatpush1.xpose.msra.mxu0 %v583
    %585 = vmatprep.subr.mxu0 0.0
    %v586 = vand.u32 %v98, 4294901760
    %v587 = vsub.f32 %v98, %v586
    %v588 = vand.u32 %v587, 4294901760
    %589 = vmatpush1.xpose.msra.mxu0 %v588
    %590 = vmatprep.subr.mxu0 0.0
    %v591 = vand.u32 %v99, 4294901760
    %v592 = vsub.f32 %v99, %v591
    %v593 = vand.u32 %v592, 4294901760
    %594 = vmatpush1.xpose.msra.mxu0 %v593
    %595 = vmatprep.subr.mxu0 0.0
    %v596 = vand.u32 %v100, 4294901760
    %v597 = vsub.f32 %v100, %v596
    %v598 = vand.u32 %v597, 4294901760
    %599 = vmatpush1.xpose.msra.mxu0 %v598
    %600 = vmatprep.subr.mxu0 0.0
    %v601 = vand.u32 %v101, 4294901760
    %v602 = vsub.f32 %v101, %v601
    %v603 = vand.u32 %v602, 4294901760
    %604 = vmatpush1.xpose.msra.mxu0 %v603
    %605 = vmatprep.subr.mxu0 0.0
    %v606 = vand.u32 %v102, 4294901760
    %v607 = vsub.f32 %v102, %v606
    %v608 = vand.u32 %v607, 4294901760
    %609 = vmatpush1.xpose.msra.mxu0 %v608
    %610 = vmatprep.subr.mxu0 0.0
    %v611 = vand.u32 %v103, 4294901760
    %v612 = vsub.f32 %v103, %v611
    %v613 = vand.u32 %v612, 4294901760
    %614 = vmatpush1.xpose.msra.mxu0 %v613
    %615 = vmatprep.subr.mxu0 0.0
    %v616 = vand.u32 %v104, 4294901760
    %v617 = vsub.f32 %v104, %v616
    %v618 = vand.u32 %v617, 4294901760
    %619 = vmatpush1.xpose.msra.mxu0 %v618
    %620 = vmatprep.subr.mxu0 0.0
    %621 = vmatpush1.xpose.msra.mxu0 0.0
    %622 = vmatprep.subr.mxu0 0.0
    %623 = vmatpush1.xpose.msra.mxu0 0.0
    %624 = vmatprep.subr.mxu0 0.0
    %625 = vmatpush1.xpose.msra.mxu0 0.0
    %626 = vmatprep.subr.mxu0 0.0
    %627 = vmatpush1.xpose.msra.mxu0 0.0
    %628 = vmatprep.subr.mxu0 0.0
    %629 = vmatpush1.xpose.msra.mxu0 0.0
    %630 = vmatprep.subr.mxu0 0.0
    %631 = vmatpush1.xpose.msra.mxu0 0.0
    %632 = vmatprep.subr.mxu0 0.0
    %633 = vmatpush1.xpose.msra.mxu0 0.0
    %634 = vmatprep.subr.mxu0 0.0
    %635 = vmatpush1.xpose.msra.mxu0 0.0
    %636 = vmatprep.subr.mxu0 0.0
    %637 = vmatpush1.xpose.msra.mxu0 0.0
    %638 = vmatprep.subr.mxu0 0.0
    %639 = vmatpush1.xpose.msra.mxu0 0.0
    %640 = vmatprep.subr.mxu0 0.0
    %641 = vmatpush1.xpose.msra.mxu0 0.0
    %642 = vmatprep.subr.mxu0 0.0
    %643 = vmatpush1.xpose.msra.mxu0 0.0
    %644 = vmatprep.subr.mxu0 0.0
    %645 = vmatpush1.xpose.msra.mxu0 0.0
    %646 = vmatprep.subr.mxu0 0.0
    %647 = vmatpush1.xpose.msra.mxu0 0.0
    %648 = vmatprep.subr.mxu0 0.0
    %649 = vmatpush1.xpose.msra.mxu0 0.0
    %650 = vmatprep.subr.mxu0 0.0
    %651 = vmatpush1.xpose.msra.mxu0 0.0
    %652 = vmatprep.mubr.f32.mxu0 0.0
    %v653 = vand.u32 %v71, 4294901760
    %654 = vmatmul.mubr.f32.gmra.mrb[0].mxu0 %v653
    %v655 = vpop.f32.mrb[0].mxu0
    %v656 = vadd.f32 %v537, %v655
    %v657 = vpop.f32.mrb[0].mxu0
    %658 = vdwg.mxu0
    %659 = vmatprep.subr.mxu0 0.0
    %v660 = vand.u32 %v89, 4294901760
    %661 = vmatpush1.xpose.msra.mxu0 %v660
    %662 = vmatprep.subr.mxu0 0.0
    %v663 = vand.u32 %v90, 4294901760
    %664 = vmatpush1.xpose.msra.mxu0 %v663
    %665 = vmatprep.subr.mxu0 0.0
    %v666 = vand.u32 %v91, 4294901760
    %667 = vmatpush1.xpose.msra.mxu0 %v666
    %668 = vmatprep.subr.mxu0 0.0
    %v669 = vand.u32 %v92, 4294901760
    %670 = vmatpush1.xpose.msra.mxu0 %v669
    %671 = vmatprep.subr.mxu0 0.0
    %v672 = vand.u32 %v93, 4294901760
    %673 = vmatpush1.xpose.msra.mxu0 %v672
    %674 = vmatprep.subr.mxu0 0.0
    %v675 = vand.u32 %v94, 4294901760
    %676 = vmatpush1.xpose.msra.mxu0 %v675
    %677 = vmatprep.subr.mxu0 0.0
    %v678 = vand.u32 %v95, 4294901760
    %679 = vmatpush1.xpose.msra.mxu0 %v678
    %680 = vmatprep.subr.mxu0 0.0
    %v681 = vand.u32 %v96, 4294901760
    %682 = vmatpush1.xpose.msra.mxu0 %v681
    %683 = vmatprep.subr.mxu0 0.0
    %v684 = vand.u32 %v97, 4294901760
    %685 = vmatpush1.xpose.msra.mxu0 %v684
    %686 = vmatprep.subr.mxu0 0.0
    %v687 = vand.u32 %v98, 4294901760
    %688 = vmatpush1.xpose.msra.mxu0 %v687
    %689 = vmatprep.subr.mxu0 0.0
    %v690 = vand.u32 %v99, 4294901760
    %691 = vmatpush1.xpose.msra.mxu0 %v690
    %692 = vmatprep.subr.mxu0 0.0
    %v693 = vand.u32 %v100, 4294901760
    %694 = vmatpush1.xpose.msra.mxu0 %v693
    %695 = vmatprep.subr.mxu0 0.0
    %v696 = vand.u32 %v101, 4294901760
    %697 = vmatpush1.xpose.msra.mxu0 %v696
    %698 = vmatprep.subr.mxu0 0.0
    %v699 = vand.u32 %v102, 4294901760
    %700 = vmatpush1.xpose.msra.mxu0 %v699
    %701 = vmatprep.subr.mxu0 0.0
    %v702 = vand.u32 %v103, 4294901760
    %703 = vmatpush1.xpose.msra.mxu0 %v702
    %704 = vmatprep.subr.mxu0 0.0
    %v705 = vand.u32 %v104, 4294901760
    %706 = vmatpush1.xpose.msra.mxu0 %v705
    %707 = vmatprep.subr.mxu0 0.0
    %708 = vmatpush1.xpose.msra.mxu0 0.0
    %709 = vmatprep.subr.mxu0 0.0
    %710 = vmatpush1.xpose.msra.mxu0 0.0
    %711 = vmatprep.subr.mxu0 0.0
    %712 = vmatpush1.xpose.msra.mxu0 0.0
    %713 = vmatprep.subr.mxu0 0.0
    %714 = vmatpush1.xpose.msra.mxu0 0.0
    %715 = vmatprep.subr.mxu0 0.0
    %716 = vmatpush1.xpose.msra.mxu0 0.0
    %717 = vmatprep.subr.mxu0 0.0
    %718 = vmatpush1.xpose.msra.mxu0 0.0
    %719 = vmatprep.subr.mxu0 0.0
    %720 = vmatpush1.xpose.msra.mxu0 0.0
    %721 = vmatprep.subr.mxu0 0.0
    %722 = vmatpush1.xpose.msra.mxu0 0.0
    %723 = vmatprep.subr.mxu0 0.0
    %724 = vmatpush1.xpose.msra.mxu0 0.0
    %725 = vmatprep.subr.mxu0 0.0
    %726 = vmatpush1.xpose.msra.mxu0 0.0
    %727 = vmatprep.subr.mxu0 0.0
    %728 = vmatpush1.xpose.msra.mxu0 0.0
    %729 = vmatprep.subr.mxu0 0.0
    %730 = vmatpush1.xpose.msra.mxu0 0.0
    %731 = vmatprep.subr.mxu0 0.0
    %732 = vmatpush1.xpose.msra.mxu0 0.0
    %733 = vmatprep.subr.mxu0 0.0
    %734 = vmatpush1.xpose.msra.mxu0 0.0
    %735 = vmatprep.subr.mxu0 0.0
    %736 = vmatpush1.xpose.msra.mxu0 0.0
    %737 = vmatprep.subr.mxu0 0.0
    %738 = vmatpush1.xpose.msra.mxu0 0.0
    %739 = vmatprep.mubr.f32.mxu0 0.0
    %v740 = vand.u32 %v71, 4294901760
    %741 = vmatmul.mubr.f32.gmra.mrb[0].mxu0 %v740
    %v742 = vpop.f32.mrb[0].mxu0
    %v743 = vadd.f32 %v656, %v742
    %v744 = vpop.f32.mrb[0].mxu0
    %745 = vdwg.mxu0
    %v747 = vlaneseq
    %v748 = vshrl.u32 %v747, 7
    %v749 = vsub.s32 0, %v748
    %v750 = vrot.slane %v88, %v749
    %v752 = vmul.f32 %v750, %v743
    %753 = vmatprep.subr.mxu0 0.0
    %v754 = vand.u32 %v72, 4294901760
    %755 = vmatpush1.xpose.msra.mxu0 %v754
    %756 = vmatprep.subr.mxu0 0.0
    %v757 = vand.u32 %v73, 4294901760
    %758 = vmatpush1.xpose.msra.mxu0 %v757
    %759 = vmatprep.subr.mxu0 0.0
    %v760 = vand.u32 %v74, 4294901760
    %761 = vmatpush1.xpose.msra.mxu0 %v760
    %762 = vmatprep.subr.mxu0 0.0
    %v763 = vand.u32 %v75, 4294901760
    %764 = vmatpush1.xpose.msra.mxu0 %v763
    %765 = vmatprep.subr.mxu0 0.0
    %v766 = vand.u32 %v76, 4294901760
    %767 = vmatpush1.xpose.msra.mxu0 %v766
    %768 = vmatprep.subr.mxu0 0.0
    %v769 = vand.u32 %v77, 4294901760
    %770 = vmatpush1.xpose.msra.mxu0 %v769
    %771 = vmatprep.subr.mxu0 0.0
    %v772 = vand.u32 %v78, 4294901760
    %773 = vmatpush1.xpose.msra.mxu0 %v772
    %774 = vmatprep.subr.mxu0 0.0
    %v775 = vand.u32 %v79, 4294901760
    %776 = vmatpush1.xpose.msra.mxu0 %v775
    %777 = vmatprep.subr.mxu0 0.0
    %v778 = vand.u32 %v80, 4294901760
    %779 = vmatpush1.xpose.msra.mxu0 %v778
    %780 = vmatprep.subr.mxu0 0.0
    %v781 = vand.u32 %v81, 4294901760
    %782 = vmatpush1.xpose.msra.mxu0 %v781
    %783 = vmatprep.subr.mxu0 0.0
    %v784 = vand.u32 %v82, 4294901760
    %785 = vmatpush1.xpose.msra.mxu0 %v784
    %786 = vmatprep.subr.mxu0 0.0
    %v787 = vand.u32 %v83, 4294901760
    %788 = vmatpush1.xpose.msra.mxu0 %v787
    %789 = vmatprep.subr.mxu0 0.0
    %v790 = vand.u32 %v84, 4294901760
    %791 = vmatpush1.xpose.msra.mxu0 %v790
    %792 = vmatprep.subr.mxu0 0.0
    %v793 = vand.u32 %v85, 4294901760
    %794 = vmatpush1.xpose.msra.mxu0 %v793
    %795 = vmatprep.subr.mxu0 0.0
    %v796 = vand.u32 %v86, 4294901760
    %797 = vmatpush1.xpose.msra.mxu0 %v796
    %798 = vmatprep.subr.mxu0 0.0
    %v799 = vand.u32 %v87, 4294901760
    %800 = vmatpush1.xpose.msra.mxu0 %v799
    %801 = vmatprep.subr.mxu0 0.0
    %802 = vmatpush1.xpose.msra.mxu0 0.0
    %803 = vmatprep.subr.mxu0 0.0
    %804 = vmatpush1.xpose.msra.mxu0 0.0
    %805 = vmatprep.subr.mxu0 0.0
    %806 = vmatpush1.xpose.msra.mxu0 0.0
    %807 = vmatprep.subr.mxu0 0.0
    %808 = vmatpush1.xpose.msra.mxu0 0.0
    %809 = vmatprep.subr.mxu0 0.0
    %810 = vmatpush1.xpose.msra.mxu0 0.0
    %811 = vmatprep.subr.mxu0 0.0
    %812 = vmatpush1.xpose.msra.mxu0 0.0
    %813 = vmatprep.subr.mxu0 0.0
    %814 = vmatpush1.xpose.msra.mxu0 0.0
    %815 = vmatprep.subr.mxu0 0.0
    %816 = vmatpush1.xpose.msra.mxu0 0.0
    %817 = vmatprep.subr.mxu0 0.0
    %818 = vmatpush1.xpose.msra.mxu0 0.0
    %819 = vmatprep.subr.mxu0 0.0
    %820 = vmatpush1.xpose.msra.mxu0 0.0
    %821 = vmatprep.subr.mxu0 0.0
    %822 = vmatpush1.xpose.msra.mxu0 0.0
    %823 = vmatprep.subr.mxu0 0.0
    %824 = vmatpush1.xpose.msra.mxu0 0.0
    %825 = vmatprep.subr.mxu0 0.0
    %826 = vmatpush1.xpose.msra.mxu0 0.0
    %827 = vmatprep.subr.mxu0 0.0
    %828 = vmatpush1.xpose.msra.mxu0 0.0
    %829 = vmatprep.subr.mxu0 0.0
    %830 = vmatpush1.xpose.msra.mxu0 0.0
    %831 = vmatprep.subr.mxu0 0.0
    %832 = vmatpush1.xpose.msra.mxu0 0.0
    %833 = vmatprep.mubr.f32.mxu0 0.0
    %v834 = vand.u32 %v63, 4294901760
    %v835 = vsub.f32 %v63, %v834
    %v836 = vand.u32 %v835, 4294901760
    %v837 = vsub.f32 %v835, %v836
    %v838 = vand.u32 %v837, 4294901760
    %839 = vmatmul.mubr.f32.gmra.mrb[0].mxu0 %v838
    %v840 = vpop.f32.mrb[0].mxu0
    %v841 = vadd.f32 %v752, %v840
    %v842 = vpop.f32.mrb[0].mxu0
    %843 = vdwg.mxu0
    %844 = vmatprep.subr.mxu0 0.0
    %v845 = vand.u32 %v72, 4294901760
    %v846 = vsub.f32 %v72, %v845
    %v847 = vand.u32 %v846, 4294901760
    %v848 = vsub.f32 %v846, %v847
    %v849 = vand.u32 %v848, 4294901760
    %850 = vmatpush1.xpose.msra.mxu0 %v849
    %851 = vmatprep.subr.mxu0 0.0
    %v852 = vand.u32 %v73, 4294901760
    %v853 = vsub.f32 %v73, %v852
    %v854 = vand.u32 %v853, 4294901760
    %v855 = vsub.f32 %v853, %v854
    %v856 = vand.u32 %v855, 4294901760
    %857 = vmatpush1.xpose.msra.mxu0 %v856
    %858 = vmatprep.subr.mxu0 0.0
    %v859 = vand.u32 %v74, 4294901760
    %v860 = vsub.f32 %v74, %v859
    %v861 = vand.u32 %v860, 4294901760
    %v862 = vsub.f32 %v860, %v861
    %v863 = vand.u32 %v862, 4294901760
    %864 = vmatpush1.xpose.msra.mxu0 %v863
    %865 = vmatprep.subr.mxu0 0.0
    %v866 = vand.u32 %v75, 4294901760
    %v867 = vsub.f32 %v75, %v866
    %v868 = vand.u32 %v867, 4294901760
    %v869 = vsub.f32 %v867, %v868
    %v870 = vand.u32 %v869, 4294901760
    %871 = vmatpush1.xpose.msra.mxu0 %v870
    %872 = vmatprep.subr.mxu0 0.0
    %v873 = vand.u32 %v76, 4294901760
    %v874 = vsub.f32 %v76, %v873
    %v875 = vand.u32 %v874, 4294901760
    %v876 = vsub.f32 %v874, %v875
    %v877 = vand.u32 %v876, 4294901760
    %878 = vmatpush1.xpose.msra.mxu0 %v877
    %879 = vmatprep.subr.mxu0 0.0
    %v880 = vand.u32 %v77, 4294901760
    %v881 = vsub.f32 %v77, %v880
    %v882 = vand.u32 %v881, 4294901760
    %v883 = vsub.f32 %v881, %v882
    %v884 = vand.u32 %v883, 4294901760
    %885 = vmatpush1.xpose.msra.mxu0 %v884
    %886 = vmatprep.subr.mxu0 0.0
    %v887 = vand.u32 %v78, 4294901760
    %v888 = vsub.f32 %v78, %v887
    %v889 = vand.u32 %v888, 4294901760
    %v890 = vsub.f32 %v888, %v889
    %v891 = vand.u32 %v890, 4294901760
    %892 = vmatpush1.xpose.msra.mxu0 %v891
    %893 = vmatprep.subr.mxu0 0.0
    %v894 = vand.u32 %v79, 4294901760
    %v895 = vsub.f32 %v79, %v894
    %v896 = vand.u32 %v895, 4294901760
    %v897 = vsub.f32 %v895, %v896
    %v898 = vand.u32 %v897, 4294901760
    %899 = vmatpush1.xpose.msra.mxu0 %v898
    %900 = vmatprep.subr.mxu0 0.0
    %v901 = vand.u32 %v80, 4294901760
    %v902 = vsub.f32 %v80, %v901
    %v903 = vand.u32 %v902, 4294901760
    %v904 = vsub.f32 %v902, %v903
    %v905 = vand.u32 %v904, 4294901760
    %906 = vmatpush1.xpose.msra.mxu0 %v905
    %907 = vmatprep.subr.mxu0 0.0
    %v908 = vand.u32 %v81, 4294901760
    %v909 = vsub.f32 %v81, %v908
    %v910 = vand.u32 %v909, 4294901760
    %v911 = vsub.f32 %v909, %v910
    %v912 = vand.u32 %v911, 4294901760
    %913 = vmatpush1.xpose.msra.mxu0 %v912
    %914 = vmatprep.subr.mxu0 0.0
    %v915 = vand.u32 %v82, 4294901760
    %v916 = vsub.f32 %v82, %v915
    %v917 = vand.u32 %v916, 4294901760
    %v918 = vsub.f32 %v916, %v917
    %v919 = vand.u32 %v918, 4294901760
    %920 = vmatpush1.xpose.msra.mxu0 %v919
    %921 = vmatprep.subr.mxu0 0.0
    %v922 = vand.u32 %v83, 4294901760
    %v923 = vsub.f32 %v83, %v922
    %v924 = vand.u32 %v923, 4294901760
    %v925 = vsub.f32 %v923, %v924
    %v926 = vand.u32 %v925, 4294901760
    %927 = vmatpush1.xpose.msra.mxu0 %v926
    %928 = vmatprep.subr.mxu0 0.0
    %v929 = vand.u32 %v84, 4294901760
    %v930 = vsub.f32 %v84, %v929
    %v931 = vand.u32 %v930, 4294901760
    %v932 = vsub.f32 %v930, %v931
    %v933 = vand.u32 %v932, 4294901760
    %934 = vmatpush1.xpose.msra.mxu0 %v933
    %935 = vmatprep.subr.mxu0 0.0
    %v936 = vand.u32 %v85, 4294901760
    %v937 = vsub.f32 %v85, %v936
    %v938 = vand.u32 %v937, 4294901760
    %v939 = vsub.f32 %v937, %v938
    %v940 = vand.u32 %v939, 4294901760
    %941 = vmatpush1.xpose.msra.mxu0 %v940
    %942 = vmatprep.subr.mxu0 0.0
    %v943 = vand.u32 %v86, 4294901760
    %v944 = vsub.f32 %v86, %v943
    %v945 = vand.u32 %v944, 4294901760
    %v946 = vsub.f32 %v944, %v945
    %v947 = vand.u32 %v946, 4294901760
    %948 = vmatpush1.xpose.msra.mxu0 %v947
    %949 = vmatprep.subr.mxu0 0.0
    %v950 = vand.u32 %v87, 4294901760
    %v951 = vsub.f32 %v87, %v950
    %v952 = vand.u32 %v951, 4294901760
    %v953 = vsub.f32 %v951, %v952
    %v954 = vand.u32 %v953, 4294901760
    %955 = vmatpush1.xpose.msra.mxu0 %v954
    %956 = vmatprep.subr.mxu0 0.0
    %957 = vmatpush1.xpose.msra.mxu0 0.0
    %958 = vmatprep.subr.mxu0 0.0
    %959 = vmatpush1.xpose.msra.mxu0 0.0
    %960 = vmatprep.subr.mxu0 0.0
    %961 = vmatpush1.xpose.msra.mxu0 0.0
    %962 = vmatprep.subr.mxu0 0.0
    %963 = vmatpush1.xpose.msra.mxu0 0.0
    %964 = vmatprep.subr.mxu0 0.0
    %965 = vmatpush1.xpose.msra.mxu0 0.0
    %966 = vmatprep.subr.mxu0 0.0
    %967 = vmatpush1.xpose.msra.mxu0 0.0
    %968 = vmatprep.subr.mxu0 0.0
    %969 = vmatpush1.xpose.msra.mxu0 0.0
    %970 = vmatprep.subr.mxu0 0.0
    %971 = vmatpush1.xpose.msra.mxu0 0.0
    %972 = vmatprep.subr.mxu0 0.0
    %973 = vmatpush1.xpose.msra.mxu0 0.0
    %974 = vmatprep.subr.mxu0 0.0
    %975 = vmatpush1.xpose.msra.mxu0 0.0
    %976 = vmatprep.subr.mxu0 0.0
    %977 = vmatpush1.xpose.msra.mxu0 0.0
    %978 = vmatprep.subr.mxu0 0.0
    %979 = vmatpush1.xpose.msra.mxu0 0.0
    %980 = vmatprep.subr.mxu0 0.0
    %981 = vmatpush1.xpose.msra.mxu0 0.0
    %982 = vmatprep.subr.mxu0 0.0
    %983 = vmatpush1.xpose.msra.mxu0 0.0
    %984 = vmatprep.subr.mxu0 0.0
    %985 = vmatpush1.xpose.msra.mxu0 0.0
    %986 = vmatprep.subr.mxu0 0.0
    %987 = vmatpush1.xpose.msra.mxu0 0.0
    %988 = vmatprep.mubr.f32.mxu0 0.0
    %v989 = vand.u32 %v63, 4294901760
    %990 = vmatmul.mubr.f32.gmra.mrb[0].mxu0 %v989
    %v991 = vpop.f32.mrb[0].mxu0
    %v992 = vadd.f32 %v841, %v991
    %v993 = vpop.f32.mrb[0].mxu0
    %994 = vdwg.mxu0
    %995 = vmatprep.subr.mxu0 0.0
    %v996 = vand.u32 %v72, 4294901760
    %v997 = vsub.f32 %v72, %v996
    %998 = vmatpush1.xpose.msra.mxu0 %v997
    %999 = vmatprep.subr.mxu0 0.0
    %v1000 = vand.u32 %v73, 4294901760
    %v1001 = vsub.f32 %v73, %v1000
    %1002 = vmatpush1.xpose.msra.mxu0 %v1001
    %1003 = vmatprep.subr.mxu0 0.0
    %v1004 = vand.u32 %v74, 4294901760
    %v1005 = vsub.f32 %v74, %v1004
    %1006 = vmatpush1.xpose.msra.mxu0 %v1005
    %1007 = vmatprep.subr.mxu0 0.0
    %v1008 = vand.u32 %v75, 4294901760
    %v1009 = vsub.f32 %v75, %v1008
    %1010 = vmatpush1.xpose.msra.mxu0 %v1009
    %1011 = vmatprep.subr.mxu0 0.0
    %v1012 = vand.u32 %v76, 4294901760
    %v1013 = vsub.f32 %v76, %v1012
    %1014 = vmatpush1.xpose.msra.mxu0 %v1013
    %1015 = vmatprep.subr.mxu0 0.0
    %v1016 = vand.u32 %v77, 4294901760
    %v1017 = vsub.f32 %v77, %v1016
    %1018 = vmatpush1.xpose.msra.mxu0 %v1017
    %1019 = vmatprep.subr.mxu0 0.0
    %v1020 = vand.u32 %v78, 4294901760
    %v1021 = vsub.f32 %v78, %v1020
    %1022 = vmatpush1.xpose.msra.mxu0 %v1021
    %1023 = vmatprep.subr.mxu0 0.0
    %v1024 = vand.u32 %v79, 4294901760
    %v1025 = vsub.f32 %v79, %v1024
    %1026 = vmatpush1.xpose.msra.mxu0 %v1025
    %1027 = vmatprep.subr.mxu0 0.0
    %v1028 = vand.u32 %v80, 4294901760
    %v1029 = vsub.f32 %v80, %v1028
    %1030 = vmatpush1.xpose.msra.mxu0 %v1029
    %1031 = vmatprep.subr.mxu0 0.0
    %v1032 = vand.u32 %v81, 4294901760
    %v1033 = vsub.f32 %v81, %v1032
    %1034 = vmatpush1.xpose.msra.mxu0 %v1033
    %1035 = vmatprep.subr.mxu0 0.0
    %v1036 = vand.u32 %v82, 4294901760
    %v1037 = vsub.f32 %v82, %v1036
    %1038 = vmatpush1.xpose.msra.mxu0 %v1037
    %1039 = vmatprep.subr.mxu0 0.0
    %v1040 = vand.u32 %v83, 4294901760
    %v1041 = vsub.f32 %v83, %v1040
    %1042 = vmatpush1.xpose.msra.mxu0 %v1041
    %1043 = vmatprep.subr.mxu0 0.0
    %v1044 = vand.u32 %v84, 4294901760
    %v1045 = vsub.f32 %v84, %v1044
    %1046 = vmatpush1.xpose.msra.mxu0 %v1045
    %1047 = vmatprep.subr.mxu0 0.0
    %v1048 = vand.u32 %v85, 4294901760
    %v1049 = vsub.f32 %v85, %v1048
    %1050 = vmatpush1.xpose.msra.mxu0 %v1049
    %1051 = vmatprep.subr.mxu0 0.0
    %v1052 = vand.u32 %v86, 4294901760
    %v1053 = vsub.f32 %v86, %v1052
    %1054 = vmatpush1.xpose.msra.mxu0 %v1053
    %1055 = vmatprep.subr.mxu0 0.0
    %v1056 = vand.u32 %v87, 4294901760
    %v1057 = vsub.f32 %v87, %v1056
    %1058 = vmatpush1.xpose.msra.mxu0 %v1057
    %1059 = vmatprep.subr.mxu0 0.0
    %1060 = vmatpush1.xpose.msra.mxu0 0.0
    %1061 = vmatprep.subr.mxu0 0.0
    %1062 = vmatpush1.xpose.msra.mxu0 0.0
    %1063 = vmatprep.subr.mxu0 0.0
    %1064 = vmatpush1.xpose.msra.mxu0 0.0
    %1065 = vmatprep.subr.mxu0 0.0
    %1066 = vmatpush1.xpose.msra.mxu0 0.0
    %1067 = vmatprep.subr.mxu0 0.0
    %1068 = vmatpush1.xpose.msra.mxu0 0.0
    %1069 = vmatprep.subr.mxu0 0.0
    %1070 = vmatpush1.xpose.msra.mxu0 0.0
    %1071 = vmatprep.subr.mxu0 0.0
    %1072 = vmatpush1.xpose.msra.mxu0 0.0
    %1073 = vmatprep.subr.mxu0 0.0
    %1074 = vmatpush1.xpose.msra.mxu0 0.0
    %1075 = vmatprep.subr.mxu0 0.0
    %1076 = vmatpush1.xpose.msra.mxu0 0.0
    %1077 = vmatprep.subr.mxu0 0.0
    %1078 = vmatpush1.xpose.msra.mxu0 0.0
    %1079 = vmatprep.subr.mxu0 0.0
    %1080 = vmatpush1.xpose.msra.mxu0 0.0
    %1081 = vmatprep.subr.mxu0 0.0
    %1082 = vmatpush1.xpose.msra.mxu0 0.0
    %1083 = vmatprep.subr.mxu0 0.0
    %1084 = vmatpush1.xpose.msra.mxu0 0.0
    %1085 = vmatprep.subr.mxu0 0.0
    %1086 = vmatpush1.xpose.msra.mxu0 0.0
    %1087 = vmatprep.subr.mxu0 0.0
    %1088 = vmatpush1.xpose.msra.mxu0 0.0
    %1089 = vmatprep.subr.mxu0 0.0
    %1090 = vmatpush1.xpose.msra.mxu0 0.0
    %1091 = vmatprep.mubr.f32.mxu0 0.0
    %v1092 = vand.u32 %v63, 4294901760
    %v1093 = vsub.f32 %v63, %v1092
    %1094 = vmatmul.mubr.f32.gmra.mrb[0].mxu0 %v1093
    %v1095 = vpop.f32.mrb[0].mxu0
    %v1096 = vadd.f32 %v992, %v1095
    %v1097 = vpop.f32.mrb[0].mxu0
    %1098 = vdwg.mxu0
    %1099 = vmatprep.subr.mxu0 0.0
    %v1100 = vand.u32 %v72, 4294901760
    %1101 = vmatpush1.xpose.msra.mxu0 %v1100
    %1102 = vmatprep.subr.mxu0 0.0
    %v1103 = vand.u32 %v73, 4294901760
    %1104 = vmatpush1.xpose.msra.mxu0 %v1103
    %1105 = vmatprep.subr.mxu0 0.0
    %v1106 = vand.u32 %v74, 4294901760
    %1107 = vmatpush1.xpose.msra.mxu0 %v1106
    %1108 = vmatprep.subr.mxu0 0.0
    %v1109 = vand.u32 %v75, 4294901760
    %1110 = vmatpush1.xpose.msra.mxu0 %v1109
    %1111 = vmatprep.subr.mxu0 0.0
    %v1112 = vand.u32 %v76, 4294901760
    %1113 = vmatpush1.xpose.msra.mxu0 %v1112
    %1114 = vmatprep.subr.mxu0 0.0
    %v1115 = vand.u32 %v77, 4294901760
    %1116 = vmatpush1.xpose.msra.mxu0 %v1115
    %1117 = vmatprep.subr.mxu0 0.0
    %v1118 = vand.u32 %v78, 4294901760
    %1119 = vmatpush1.xpose.msra.mxu0 %v1118
    %1120 = vmatprep.subr.mxu0 0.0
    %v1121 = vand.u32 %v79, 4294901760
    %1122 = vmatpush1.xpose.msra.mxu0 %v1121
    %1123 = vmatprep.subr.mxu0 0.0
    %v1124 = vand.u32 %v80, 4294901760
    %1125 = vmatpush1.xpose.msra.mxu0 %v1124
    %1126 = vmatprep.subr.mxu0 0.0
    %v1127 = vand.u32 %v81, 4294901760
    %1128 = vmatpush1.xpose.msra.mxu0 %v1127
    %1129 = vmatprep.subr.mxu0 0.0
    %v1130 = vand.u32 %v82, 4294901760
    %1131 = vmatpush1.xpose.msra.mxu0 %v1130
    %1132 = vmatprep.subr.mxu0 0.0
    %v1133 = vand.u32 %v83, 4294901760
    %1134 = vmatpush1.xpose.msra.mxu0 %v1133
    %1135 = vmatprep.subr.mxu0 0.0
    %v1136 = vand.u32 %v84, 4294901760
    %1137 = vmatpush1.xpose.msra.mxu0 %v1136
    %1138 = vmatprep.subr.mxu0 0.0
    %v1139 = vand.u32 %v85, 4294901760
    %1140 = vmatpush1.xpose.msra.mxu0 %v1139
    %1141 = vmatprep.subr.mxu0 0.0
    %v1142 = vand.u32 %v86, 4294901760
    %1143 = vmatpush1.xpose.msra.mxu0 %v1142
    %1144 = vmatprep.subr.mxu0 0.0
    %v1145 = vand.u32 %v87, 4294901760
    %1146 = vmatpush1.xpose.msra.mxu0 %v1145
    %1147 = vmatprep.subr.mxu0 0.0
    %1148 = vmatpush1.xpose.msra.mxu0 0.0
    %1149 = vmatprep.subr.mxu0 0.0
    %1150 = vmatpush1.xpose.msra.mxu0 0.0
    %1151 = vmatprep.subr.mxu0 0.0
    %1152 = vmatpush1.xpose.msra.mxu0 0.0
    %1153 = vmatprep.subr.mxu0 0.0
    %1154 = vmatpush1.xpose.msra.mxu0 0.0
    %1155 = vmatprep.subr.mxu0 0.0
    %1156 = vmatpush1.xpose.msra.mxu0 0.0
    %1157 = vmatprep.subr.mxu0 0.0
    %1158 = vmatpush1.xpose.msra.mxu0 0.0
    %1159 = vmatprep.subr.mxu0 0.0
    %1160 = vmatpush1.xpose.msra.mxu0 0.0
    %1161 = vmatprep.subr.mxu0 0.0
    %1162 = vmatpush1.xpose.msra.mxu0 0.0
    %1163 = vmatprep.subr.mxu0 0.0
    %1164 = vmatpush1.xpose.msra.mxu0 0.0
    %1165 = vmatprep.subr.mxu0 0.0
    %1166 = vmatpush1.xpose.msra.mxu0 0.0
    %1167 = vmatprep.subr.mxu0 0.0
    %1168 = vmatpush1.xpose.msra.mxu0 0.0
    %1169 = vmatprep.subr.mxu0 0.0
    %1170 = vmatpush1.xpose.msra.mxu0 0.0
    %1171 = vmatprep.subr.mxu0 0.0
    %1172 = vmatpush1.xpose.msra.mxu0 0.0
    %1173 = vmatprep.subr.mxu0 0.0
    %1174 = vmatpush1.xpose.msra.mxu0 0.0
    %1175 = vmatprep.subr.mxu0 0.0
    %1176 = vmatpush1.xpose.msra.mxu0 0.0
    %1177 = vmatprep.subr.mxu0 0.0
    %1178 = vmatpush1.xpose.msra.mxu0 0.0
    %1179 = vmatprep.mubr.f32.mxu0 0.0
    %v1180 = vand.u32 %v63, 4294901760
    %v1181 = vsub.f32 %v63, %v1180
    %v1182 = vand.u32 %v1181, 4294901760
    %1183 = vmatmul.mubr.f32.gmra.mrb[0].mxu0 %v1182
    %v1184 = vpop.f32.mrb[0].mxu0
    %v1185 = vadd.f32 %v1096, %v1184
    %v1186 = vpop.f32.mrb[0].mxu0
    %1187 = vdwg.mxu0
    %1188 = vmatprep.subr.mxu0 0.0
    %v1189 = vand.u32 %v72, 4294901760
    %v1190 = vsub.f32 %v72, %v1189
    %v1191 = vand.u32 %v1190, 4294901760
    %1192 = vmatpush1.xpose.msra.mxu0 %v1191
    %1193 = vmatprep.subr.mxu0 0.0
    %v1194 = vand.u32 %v73, 4294901760
    %v1195 = vsub.f32 %v73, %v1194
    %v1196 = vand.u32 %v1195, 4294901760
    %1197 = vmatpush1.xpose.msra.mxu0 %v1196
    %1198 = vmatprep.subr.mxu0 0.0
    %v1199 = vand.u32 %v74, 4294901760
    %v1200 = vsub.f32 %v74, %v1199
    %v1201 = vand.u32 %v1200, 4294901760
    %1202 = vmatpush1.xpose.msra.mxu0 %v1201
    %1203 = vmatprep.subr.mxu0 0.0
    %v1204 = vand.u32 %v75, 4294901760
    %v1205 = vsub.f32 %v75, %v1204
    %v1206 = vand.u32 %v1205, 4294901760
    %1207 = vmatpush1.xpose.msra.mxu0 %v1206
    %1208 = vmatprep.subr.mxu0 0.0
    %v1209 = vand.u32 %v76, 4294901760
    %v1210 = vsub.f32 %v76, %v1209
    %v1211 = vand.u32 %v1210, 4294901760
    %1212 = vmatpush1.xpose.msra.mxu0 %v1211
    %1213 = vmatprep.subr.mxu0 0.0
    %v1214 = vand.u32 %v77, 4294901760
    %v1215 = vsub.f32 %v77, %v1214
    %v1216 = vand.u32 %v1215, 4294901760
    %1217 = vmatpush1.xpose.msra.mxu0 %v1216
    %1218 = vmatprep.subr.mxu0 0.0
    %v1219 = vand.u32 %v78, 4294901760
    %v1220 = vsub.f32 %v78, %v1219
    %v1221 = vand.u32 %v1220, 4294901760
    %1222 = vmatpush1.xpose.msra.mxu0 %v1221
    %1223 = vmatprep.subr.mxu0 0.0
    %v1224 = vand.u32 %v79, 4294901760
    %v1225 = vsub.f32 %v79, %v1224
    %v1226 = vand.u32 %v1225, 4294901760
    %1227 = vmatpush1.xpose.msra.mxu0 %v1226
    %1228 = vmatprep.subr.mxu0 0.0
    %v1229 = vand.u32 %v80, 4294901760
    %v1230 = vsub.f32 %v80, %v1229
    %v1231 = vand.u32 %v1230, 4294901760
    %1232 = vmatpush1.xpose.msra.mxu0 %v1231
    %1233 = vmatprep.subr.mxu0 0.0
    %v1234 = vand.u32 %v81, 4294901760
    %v1235 = vsub.f32 %v81, %v1234
    %v1236 = vand.u32 %v1235, 4294901760
    %1237 = vmatpush1.xpose.msra.mxu0 %v1236
    %1238 = vmatprep.subr.mxu0 0.0
    %v1239 = vand.u32 %v82, 4294901760
    %v1240 = vsub.f32 %v82, %v1239
    %v1241 = vand.u32 %v1240, 4294901760
    %1242 = vmatpush1.xpose.msra.mxu0 %v1241
    %1243 = vmatprep.subr.mxu0 0.0
    %v1244 = vand.u32 %v83, 4294901760
    %v1245 = vsub.f32 %v83, %v1244
    %v1246 = vand.u32 %v1245, 4294901760
    %1247 = vmatpush1.xpose.msra.mxu0 %v1246
    %1248 = vmatprep.subr.mxu0 0.0
    %v1249 = vand.u32 %v84, 4294901760
    %v1250 = vsub.f32 %v84, %v1249
    %v1251 = vand.u32 %v1250, 4294901760
    %1252 = vmatpush1.xpose.msra.mxu0 %v1251
    %1253 = vmatprep.subr.mxu0 0.0
    %v1254 = vand.u32 %v85, 4294901760
    %v1255 = vsub.f32 %v85, %v1254
    %v1256 = vand.u32 %v1255, 4294901760
    %1257 = vmatpush1.xpose.msra.mxu0 %v1256
    %1258 = vmatprep.subr.mxu0 0.0
    %v1259 = vand.u32 %v86, 4294901760
    %v1260 = vsub.f32 %v86, %v1259
    %v1261 = vand.u32 %v1260, 4294901760
    %1262 = vmatpush1.xpose.msra.mxu0 %v1261
    %1263 = vmatprep.subr.mxu0 0.0
    %v1264 = vand.u32 %v87, 4294901760
    %v1265 = vsub.f32 %v87, %v1264
    %v1266 = vand.u32 %v1265, 4294901760
    %1267 = vmatpush1.xpose.msra.mxu0 %v1266
    %1268 = vmatprep.subr.mxu0 0.0
    %1269 = vmatpush1.xpose.msra.mxu0 0.0
    %1270 = vmatprep.subr.mxu0 0.0
    %1271 = vmatpush1.xpose.msra.mxu0 0.0
    %1272 = vmatprep.subr.mxu0 0.0
    %1273 = vmatpush1.xpose.msra.mxu0 0.0
    %1274 = vmatprep.subr.mxu0 0.0
    %1275 = vmatpush1.xpose.msra.mxu0 0.0
    %1276 = vmatprep.subr.mxu0 0.0
    %1277 = vmatpush1.xpose.msra.mxu0 0.0
    %1278 = vmatprep.subr.mxu0 0.0
    %1279 = vmatpush1.xpose.msra.mxu0 0.0
    %1280 = vmatprep.subr.mxu0 0.0
    %1281 = vmatpush1.xpose.msra.mxu0 0.0
    %1282 = vmatprep.subr.mxu0 0.0
    %1283 = vmatpush1.xpose.msra.mxu0 0.0
    %1284 = vmatprep.subr.mxu0 0.0
    %1285 = vmatpush1.xpose.msra.mxu0 0.0
    %1286 = vmatprep.subr.mxu0 0.0
    %1287 = vmatpush1.xpose.msra.mxu0 0.0
    %1288 = vmatprep.subr.mxu0 0.0
    %1289 = vmatpush1.xpose.msra.mxu0 0.0
    %1290 = vmatprep.subr.mxu0 0.0
    %1291 = vmatpush1.xpose.msra.mxu0 0.0
    %1292 = vmatprep.subr.mxu0 0.0
    %1293 = vmatpush1.xpose.msra.mxu0 0.0
    %1294 = vmatprep.subr.mxu0 0.0
    %1295 = vmatpush1.xpose.msra.mxu0 0.0
    %1296 = vmatprep.subr.mxu0 0.0
    %1297 = vmatpush1.xpose.msra.mxu0 0.0
    %1298 = vmatprep.subr.mxu0 0.0
    %1299 = vmatpush1.xpose.msra.mxu0 0.0
    %1300 = vmatprep.mubr.f32.mxu0 0.0
    %v1301 = vand.u32 %v63, 4294901760
    %1302 = vmatmul.mubr.f32.gmra.mrb[0].mxu0 %v1301
    %v1303 = vpop.f32.mrb[0].mxu0
    %v1304 = vadd.f32 %v1185, %v1303
    %v1305 = vpop.f32.mrb[0].mxu0
    %1306 = vdwg.mxu0
    %1307 = vmatprep.subr.mxu0 0.0
    %v1308 = vand.u32 %v72, 4294901760
    %1309 = vmatpush1.xpose.msra.mxu0 %v1308
    %1310 = vmatprep.subr.mxu0 0.0
    %v1311 = vand.u32 %v73, 4294901760
    %1312 = vmatpush1.xpose.msra.mxu0 %v1311
    %1313 = vmatprep.subr.mxu0 0.0
    %v1314 = vand.u32 %v74, 4294901760
    %1315 = vmatpush1.xpose.msra.mxu0 %v1314
    %1316 = vmatprep.subr.mxu0 0.0
    %v1317 = vand.u32 %v75, 4294901760
    %1318 = vmatpush1.xpose.msra.mxu0 %v1317
    %1319 = vmatprep.subr.mxu0 0.0
    %v1320 = vand.u32 %v76, 4294901760
    %1321 = vmatpush1.xpose.msra.mxu0 %v1320
    %1322 = vmatprep.subr.mxu0 0.0
    %v1323 = vand.u32 %v77, 4294901760
    %1324 = vmatpush1.xpose.msra.mxu0 %v1323
    %1325 = vmatprep.subr.mxu0 0.0
    %v1326 = vand.u32 %v78, 4294901760
    %1327 = vmatpush1.xpose.msra.mxu0 %v1326
    %1328 = vmatprep.subr.mxu0 0.0
    %v1329 = vand.u32 %v79, 4294901760
    %1330 = vmatpush1.xpose.msra.mxu0 %v1329
    %1331 = vmatprep.subr.mxu0 0.0
    %v1332 = vand.u32 %v80, 4294901760
    %1333 = vmatpush1.xpose.msra.mxu0 %v1332
    %1334 = vmatprep.subr.mxu0 0.0
    %v1335 = vand.u32 %v81, 4294901760
    %1336 = vmatpush1.xpose.msra.mxu0 %v1335
    %1337 = vmatprep.subr.mxu0 0.0
    %v1338 = vand.u32 %v82, 4294901760
    %1339 = vmatpush1.xpose.msra.mxu0 %v1338
    %1340 = vmatprep.subr.mxu0 0.0
    %v1341 = vand.u32 %v83, 4294901760
    %1342 = vmatpush1.xpose.msra.mxu0 %v1341
    %1343 = vmatprep.subr.mxu0 0.0
    %v1344 = vand.u32 %v84, 4294901760
    %1345 = vmatpush1.xpose.msra.mxu0 %v1344
    %1346 = vmatprep.subr.mxu0 0.0
    %v1347 = vand.u32 %v85, 4294901760
    %1348 = vmatpush1.xpose.msra.mxu0 %v1347
    %1349 = vmatprep.subr.mxu0 0.0
    %v1350 = vand.u32 %v86, 4294901760
    %1351 = vmatpush1.xpose.msra.mxu0 %v1350
    %1352 = vmatprep.subr.mxu0 0.0
    %v1353 = vand.u32 %v87, 4294901760
    %1354 = vmatpush1.xpose.msra.mxu0 %v1353
    %1355 = vmatprep.subr.mxu0 0.0
    %1356 = vmatpush1.xpose.msra.mxu0 0.0
    %1357 = vmatprep.subr.mxu0 0.0
    %1358 = vmatpush1.xpose.msra.mxu0 0.0
    %1359 = vmatprep.subr.mxu0 0.0
    %1360 = vmatpush1.xpose.msra.mxu0 0.0
    %1361 = vmatprep.subr.mxu0 0.0
    %1362 = vmatpush1.xpose.msra.mxu0 0.0
    %1363 = vmatprep.subr.mxu0 0.0
    %1364 = vmatpush1.xpose.msra.mxu0 0.0
    %1365 = vmatprep.subr.mxu0 0.0
    %1366 = vmatpush1.xpose.msra.mxu0 0.0
    %1367 = vmatprep.subr.mxu0 0.0
    %1368 = vmatpush1.xpose.msra.mxu0 0.0
    %1369 = vmatprep.subr.mxu0 0.0
    %1370 = vmatpush1.xpose.msra.mxu0 0.0
    %1371 = vmatprep.subr.mxu0 0.0
    %1372 = vmatpush1.xpose.msra.mxu0 0.0
    %1373 = vmatprep.subr.mxu0 0.0
    %1374 = vmatpush1.xpose.msra.mxu0 0.0
    %1375 = vmatprep.subr.mxu0 0.0
    %1376 = vmatpush1.xpose.msra.mxu0 0.0
    %1377 = vmatprep.subr.mxu0 0.0
    %1378 = vmatpush1.xpose.msra.mxu0 0.0
    %1379 = vmatprep.subr.mxu0 0.0
    %1380 = vmatpush1.xpose.msra.mxu0 0.0
    %1381 = vmatprep.subr.mxu0 0.0
    %1382 = vmatpush1.xpose.msra.mxu0 0.0
    %1383 = vmatprep.subr.mxu0 0.0
    %1384 = vmatpush1.xpose.msra.mxu0 0.0
    %1385 = vmatprep.subr.mxu0 0.0
    %1386 = vmatpush1.xpose.msra.mxu0 0.0
    %1387 = vmatprep.mubr.f32.mxu0 0.0
    %v1388 = vand.u32 %v63, 4294901760
    %1389 = vmatmul.mubr.f32.gmra.mrb[0].mxu0 %v1388
    %v1390 = vpop.f32.mrb[0].mxu0
    %v1391 = vadd.f32 %v1304, %v1390
    %v1392 = vpop.f32.mrb[0].mxu0
    %1393 = vdwg.mxu0
    %v1394 = vld [vmem:[%s5] sm:$0x1]
    %v1396 = vlaneseq
    %v1397 = vshrl.u32 %v1396, 7
    %v1398 = vsub.s32 0, %v1397
    %v1399 = vrot.slane %v1394, %v1398
    %v1401 = vadd.f32 %v1391, %v1399
    %1402 = vst [vmem:[#allocation8] sm:$0xff] %v1401
    // Predicated region
    $region38: #{tpu_custom_call.1} parent=1 // pred_check
      _
    $region39: #{tpu_custom_call.1} parent=1 // pred_check_branch
      %1404 = sbr.rel (0) target = $region41
    $region40: #{tpu_custom_call.1} parent=1 // pred_region
      %s1406 = ssub.s32 128, 128
      %1407 = vsyncadd [#allocation4], %s1406
      %s1409 = sshll.u32 [#allocation8], 4
      %s1410 = int_to_ptr.vmem [resolvable:$true] %s1409
      %1412 = dma.vmem_to_hbm [thread:$0]  %s1410, 128, %s6, [#allocation4]
    $region41: #{tpu_custom_call.1} parent=1 // pred_fallthru
      _
    // Predicated region
    $region42: #{tpu_custom_call.1} parent=1 // pred_check
      _
    $region43: #{tpu_custom_call.1} parent=1 // pred_check_branch
      %1414 = sbr.rel (0) target = $region45
    $region44: #{tpu_custom_call.1} parent=1 // pred_region
      %1415 = dma.done [#allocation4], 128
    $region45: #{tpu_custom_call.1} parent=1 // pred_fallthru
      _
    %1416 = vsyncpa [#allocation3], 1
    %1417 = vsyncpa [#allocation6], 1
    %1418 = vsyncpa [#allocation4], 1

</llo_original>
